<compile_context>
chip_gen: v6e
topology: v6e:2x2x1
jax: 0.10.0
libtpu: 0.0.40
codegen_flags: <defaults>
</compile_context>

<pallas_src>
import functools
import math

import jax
import jax.numpy as jnp
from jax import lax
from jax.experimental import pallas as pl
from jax.experimental.pallas import tpu as pltpu


EXPANSION = 4
BN_EPS = 1e-5

# (in_planes, planes, stride) for two chained Bottleneck blocks: the first
# exercises the projection shortcut (stride=2), the second the identity
# shortcut (stride=1, in_planes == expansion*planes).
BLOCK_CFGS = ((16, 8, 2), (32, 8, 1))


def _round_up(x, m):
    return (x + m - 1) // m * m


def _tile(dim, cap):
    """Largest multiple of 128 dividing `dim` (a multiple of 128) and <= cap."""
    assert dim % 128 == 0, dim
    t = min(dim, cap)
    t = max(t - (t % 128), 128)
    while dim % t:
        t -= 128
    return t


# --------------------------- fused GEMM kernel ------------------------------

def _fused_matmul_kernel(a_ref, w_ref, shift_ref, *rest, relu, has_residual):
    if has_residual:
        res_ref, o_ref, acc_ref = rest
    else:
        res_ref = None
        o_ref, acc_ref = rest

    @pl.when(pl.program_id(2) == 0)
    def _():
        acc_ref[...] = jnp.zeros_like(acc_ref)

    # bf16 x bf16 -> f32 accumulation on the MXU (BN scale pre-folded into w).
    acc_ref[...] += jnp.dot(a_ref[...], w_ref[...],
                            preferred_element_type=jnp.float32)

    @pl.when(pl.program_id(2) == pl.num_programs(2) - 1)
    def _():
        # Fused epilogue (f32): folded-BN shift + optional residual + ReLU.
        y = acc_ref[...] + shift_ref[...]
        if has_residual:
            y = y + res_ref[...].astype(jnp.float32)
        if relu:
            y = jnp.maximum(y, 0.0)
        o_ref[...] = y.astype(o_ref.dtype)


def fused_matmul(a, w, shift, residual=None, relu=False,
                 out_dtype=jnp.bfloat16, tm_cap=256, tn_cap=256, tk_cap=512):
    """relu?((a @ w) + shift [+ residual]).

    All operands are already padded to multiples of 128 and bf16 (shift is
    (1, N) f32); BN scale is pre-folded into w's columns.  f32 accumulation
    and epilogue; output dtype selectable (bf16 intermediates, f32 final).
    """
    Mp, Kp = a.shape
    Kp2, Np = w.shape
    assert Kp == Kp2, (Kp, Kp2)
    tm, tn, tk = _tile(Mp, tm_cap), _tile(Np, tn_cap), _tile(Kp, tk_cap)

    in_specs = [pl.BlockSpec((tm, tk), lambda i, j, k: (i, k)),
                pl.BlockSpec((tk, tn), lambda i, j, k: (k, j)),
                pl.BlockSpec((1, tn), lambda i, j, k: (0, j))]
    args = [a, w, shift]

    has_residual = residual is not None
    if has_residual:
        assert residual.shape == (Mp, Np), (residual.shape, (Mp, Np))
        # NOTE: this stream (and shift) is k-invariant; pl.Buffered(1) would
        # shave a small amount of VMEM but is skipped -- working set is <1 MiB.
        in_specs.append(pl.BlockSpec((tm, tn), lambda i, j, k: (i, j)))
        args.append(residual)

    return pl.pallas_call(
        functools.partial(_fused_matmul_kernel, relu=relu,
                          has_residual=has_residual),
        out_shape=jax.ShapeDtypeStruct((Mp, Np), out_dtype),
        grid_spec=pltpu.PrefetchScalarGridSpec(
            num_scalar_prefetch=0,
            grid=(Mp // tm, Np // tn, Kp // tk),
            in_specs=in_specs,
            out_specs=pl.BlockSpec((tm, tn), lambda i, j, k: (i, j)),
            scratch_shapes=[pltpu.VMEM((tm, tn), jnp.float32)]),
        compiler_params=pltpu.CompilerParams(
            dimension_semantics=("parallel", "parallel", "arbitrary")),
    )(*args)


# --------------------------- Bottleneck forward -----------------------------

def _fold_bn(bn):
    scale = bn["gamma"] * lax.rsqrt(bn["var"] + BN_EPS)
    shift = bn["beta"] - bn["mean"] * scale
    return scale, shift


def _fold_pad_weight(w, scale, kp, np_):
    """Fold BN scale into f32 weight columns, zero-pad to (kp, np_), cast bf16.
    Zero-padded rows/cols make the padded channels exact no-ops."""
    wf = w * scale[None, :]
    return jnp.pad(wf, ((0, kp - wf.shape[0]),
                        (0, np_ - wf.shape[1]))).astype(jnp.bfloat16)


def _pad_shift(shift, np_):
    return jnp.pad(shift.reshape(1, -1), ((0, 0), (0, np_ - shift.shape[0])))


def _extract_patches_3x3(x_nhwc, stride):
    """(B,H,W,C) -> (B*Ho*Wo, 9*C) patches, pad=1; tap order (dy, dx, c)."""
    B, H, W, C = x_nhwc.shape
    Ho = (H + 2 - 3) // stride + 1
    Wo = (W + 2 - 3) // stride + 1
    xp = jnp.pad(x_nhwc, ((0, 0), (1, 1), (1, 1), (0, 0)))
    cols = []
    for dy in range(3):
        for dx in range(3):
            cols.append(xp[:, dy:dy + (Ho - 1) * stride + 1:stride,
                           dx:dx + (Wo - 1) * stride + 1:stride, :])
    patches = jnp.concatenate(cols, axis=-1)          # (B, Ho, Wo, 9*C)
    return patches.reshape(B * Ho * Wo, 9 * C)


def _bottleneck_block(a_pad, p, B, H, W, cin, planes, stride, final):
    """a_pad: (Mp, Cinp) bf16, channel-padded block input.  Returns the
    channel-padded bf16 (or f32 if `final`) block output plus new H, W, C."""
    M1 = B * H * W
    Ho = (H - 1) // stride + 1
    Wo = (W - 1) // stride + 1
    M2 = B * Ho * Wo
    M2p = _round_up(M2, 128)
    Cinp = a_pad.shape[1]
    Pp = _round_up(planes, 128)
    cout = EXPANSION * planes
    Coutp = _round_up(cout, 128)

    s1, t1 = _fold_bn(p["bn1"])
    s2, t2 = _fold_bn(p["bn2"])
    s3, t3 = _fold_bn(p["bn3"])

    # conv1 (1x1) + bn1 + relu: one fused GEMM, padded bf16 in / padded bf16 out.
    h1 = fused_matmul(a_pad, _fold_pad_weight(p["w1"], s1, Cinp, Pp),
                      _pad_shift(t1, Pp), relu=True)

    # conv2 (3x3, stride, pad=1) + bn2 + relu.
    # TODO(synk): replace im2col with 9 accumulated shifted GEMMs in one
    #             pallas_call at production scale (see header).
    h1_sp = h1[:M1, :planes].reshape(B, H, W, planes)
    patches = _extract_patches_3x3(h1_sp, stride)            # (M2, 9*planes) bf16
    Kp2 = _round_up(9 * planes, 128)
    a2 = jnp.pad(patches, ((0, M2p - M2), (0, Kp2 - 9 * planes)))
    h2 = fused_matmul(a2, _fold_pad_weight(p["w2"], s2, Kp2, Pp),
                      _pad_shift(t2, Pp), relu=True)         # (M2p, Pp) bf16

    out_dtype = jnp.float32 if final else jnp.bfloat16
    if "wsc" in p:
        # Projection shortcut fused into conv3 as ONE GEMM via K-concat:
        #   out = relu([h2 | x_strided] @ [[w3*s3],[wsc*ssc]] + (t3 + tsc))
        ssc, tsc = _fold_bn(p["bnsc"])
        xs = a_pad[:M1].reshape(B, H, W, Cinp)[:, ::stride, ::stride, :]
        xs = jnp.pad(xs.reshape(M2, Cinp), ((0, M2p - M2), (0, 0)))
        a3 = jnp.concatenate([h2, xs], axis=1)               # (M2p, Pp + Cinp)
        w3sc = jnp.concatenate(
            [_fold_pad_weight(p["w3"], s3, Pp, Coutp),
             _fold_pad_weight(p["wsc"], ssc, Cinp, Coutp)], axis=0)
        out = fused_matmul(a3, w3sc, _pad_shift(t3 + tsc, Coutp),
                           relu=True, out_dtype=out_dtype)
    else:
        # Identity shortcut: the block input (already padded bf16) is the
        # residual, added in the GEMM epilogue.  Padded columns are exactly
        # zero on both sides, so the padded layout stays consistent.
        assert stride == 1 and Cinp == Coutp and a_pad.shape[0] == M2p
        out = fused_matmul(h2, _fold_pad_weight(p["w3"], s3, Pp, Coutp),
                           _pad_shift(t3, Coutp), residual=a_pad,
                           relu=True, out_dtype=out_dtype)
    return out, Ho, Wo, cout


@jax.jit
def bottleneck_forward(params, x_nchw):
    """Two chained Bottleneck blocks (projection + identity shortcut), NCHW in/out."""
    x = jnp.transpose(x_nchw, (0, 2, 3, 1)).astype(jnp.float32)   # NHWC internally
    B, H, W, C = x.shape
    Mp = _round_up(B * H * W, 128)
    Cp = _round_up(C, 128)
    # Pad once at entry; activations stay padded bf16 until the final slice.
    a = jnp.pad(x.reshape(B * H * W, C),
                ((0, Mp - B * H * W), (0, Cp - C))).astype(jnp.bfloat16)
    nblk = len(BLOCK_CFGS)
    for idx, ((cin, planes, stride), p) in enumerate(zip(BLOCK_CFGS, params)):
        assert cin == C, (cin, C)
        a, H, W, C = _bottleneck_block(a, p, B, H, W, cin, planes, stride,
                                       final=(idx == nblk - 1))
    out = a[:B * H * W, :C].astype(jnp.float32).reshape(B, H, W, C)
    return jnp.transpose(out, (0, 3, 1, 2))


# ------------------------------ reference -----------------------------------

def _ref_bn(y, bn):
    scale = bn["gamma"] / jnp.sqrt(bn["var"] + BN_EPS)
    return y * scale + (bn["beta"] - bn["mean"] * scale)


def _ref_conv(x, w_hwio, stride, padding):
    return lax.conv_general_dilated(
        x, w_hwio, window_strides=(stride, stride), padding=padding,
        dimension_numbers=("NHWC", "HWIO", "NHWC"))


def _ref_block(x, rp, stride):
    h = jax.nn.relu(_ref_bn(_ref_conv(x, rp["w1"], 1, "VALID"), rp["bn1"]))
    h = jax.nn.relu(_ref_bn(_ref_conv(h, rp["w2"], stride, ((1, 1), (1, 1))), rp["bn2"]))
    h = _ref_bn(_ref_conv(h, rp["w3"], 1, "VALID"), rp["bn3"])
    if "wsc" in rp:
        sc = _ref_bn(_ref_conv(x, rp["wsc"], stride, "VALID"), rp["bnsc"])
    else:
        sc = x
    return jax.nn.relu(h + sc)


def ref_forward(ref_params, x_nchw):
    x = jnp.transpose(x_nchw, (0, 2, 3, 1)).astype(jnp.float32)
    for (_, _, stride), rp in zip(BLOCK_CFGS, ref_params):
        x = _ref_block(x, rp, stride)
    return jnp.transpose(x, (0, 3, 1, 2))


# --------------------------- parameter init ---------------------------------

class _KeyGen:
    def __init__(self, seed):
        self._key = jax.random.PRNGKey(seed)

    def __call__(self):
        self._key, sub = jax.random.split(self._key)
        return sub


def _init_conv_hwio(kg, kh, kw, cin, cout):
    fan_in = cin * kh * kw
    return jax.random.normal(kg(), (kh, kw, cin, cout), jnp.float32) * math.sqrt(2.0 / fan_in)


def _init_bn(kg, c):
    return dict(gamma=1.0 + 0.1 * jax.random.normal(kg(), (c,), jnp.float32),
                beta=0.1 * jax.random.normal(kg(), (c,), jnp.float32),
                mean=0.1 * jax.random.normal(kg(), (c,), jnp.float32),
                var=0.9 + 0.2 * jax.random.uniform(kg(), (c,), jnp.float32))


def _init_bottleneck(kg, in_planes, planes, stride):
    exp = EXPANSION
    hwio = dict(w1=_init_conv_hwio(kg, 1, 1, in_planes, planes), bn1=_init_bn(kg, planes),
                w2=_init_conv_hwio(kg, 3, 3, planes, planes), bn2=_init_bn(kg, planes),
                w3=_init_conv_hwio(kg, 1, 1, planes, exp * planes), bn3=_init_bn(kg, exp * planes))
    if stride != 1 or in_planes != exp * planes:
        hwio["wsc"] = _init_conv_hwio(kg, 1, 1, in_planes, exp * planes)
        hwio["bnsc"] = _init_bn(kg, exp * planes)
    # Pre-transposed GEMM weights: (K_in, N_out), derived once at init; BN
    # folding / padding / bf16 cast happens at trace time inside the jit.
    gemm = dict(w1=hwio["w1"].reshape(in_planes, planes), bn1=hwio["bn1"],
                w2=hwio["w2"].reshape(9 * planes, planes), bn2=hwio["bn2"],
                w3=hwio["w3"].reshape(planes, exp * planes), bn3=hwio["bn3"])
    if "wsc" in hwio:
        gemm["wsc"] = hwio["wsc"].reshape(in_planes, exp * planes)
        gemm["bnsc"] = hwio["bnsc"]
    return gemm, hwio


def init_params(seed=0):
    kg = _KeyGen(seed)
    gemm_params, ref_params = [], []
    for (cin, planes, stride) in BLOCK_CFGS:
        g, r = _init_bottleneck(kg, cin, planes, stride)
        gemm_params.append(g)
        ref_params.append(r)
    return gemm_params, ref_params


# --------------------------------- main --------------------------------------

if __name__ == "__main__":
    gemm_params, ref_params = init_params(seed=0)
    in_planes = BLOCK_CFGS[0][0]
    x = jax.random.normal(jax.random.PRNGKey(0), (2, in_planes, 16, 16), jnp.float32)

    out = jax.block_until_ready(bottleneck_forward(gemm_params, x))

    assert out.shape == (2, EXPANSION * BLOCK_CFGS[-1][1], 8, 8), out.shape
    assert bool(jnp.all(jnp.isfinite(out))), "non-finite output"

    ref = jax.block_until_ready(ref_forward(ref_params, x))
    err = float(jnp.max(jnp.abs(out - ref)) / (jnp.max(jnp.abs(ref)) + 1e-6))
    assert err < 0.08, f"mismatch vs f32 reference: rel-to-max err {err:.4f}"

    print("KERNEL_OK")
</pallas_src>

<mosaic_0001>
module attributes {stable_mosaic.version = 11 : i64} {
  func.func @_fused_matmul_kernel(%arg0: i32, %arg1: i32, %arg2: i32, %arg3: memref<256x128xbf16, #tpu.memory_space<vmem>>, %arg4: memref<128x128xbf16, #tpu.memory_space<vmem>>, %arg5: memref<1x128xf32, #tpu.memory_space<vmem>>, %arg6: memref<256x128xbf16, #tpu.memory_space<vmem>>, %arg7: memref<256x128xf32, #tpu.memory_space<vmem>>) attributes {dimension_semantics = [#tpu.dimension_semantics<parallel>, #tpu.dimension_semantics<parallel>, #tpu.dimension_semantics<arbitrary>], iteration_bounds = array<i64: 2, 1, 1>, scalar_prefetch = 0 : i64, scratch_operands = 1 : i64, tpu.core_type = #tpu.core_type<tc>, window_params = [{transform_indices = @transform_0, window_bounds = array<i64: 256, 128>}, {transform_indices = @transform_1, window_bounds = array<i64: 128, 128>}, {transform_indices = @transform_2, window_bounds = array<i64: 1, 128>}, {transform_indices = @transform_3, window_bounds = array<i64: 256, 128>}]} {
    %c0_i32 = arith.constant 0 : i32
    %0 = arith.cmpi eq, %arg2, %c0_i32 : i32
    %1 = arith.extui %0 : i1 to i32
    %c0_i32_0 = arith.constant 0 : i32
    %2 = arith.cmpi ne, %1, %c0_i32_0 : i32
    scf.if %2 {
      %cst_10 = arith.constant 0.000000e+00 : f32
      %12 = vector.broadcast %cst_10 : f32 to vector<256x128xf32>
      %c0_11 = arith.constant 0 : index
      %c0_12 = arith.constant 0 : index
      %13 = vector.load %arg7[%c0_11, %c0_12] : memref<256x128xf32, #tpu.memory_space<vmem>>, vector<256x128xf32>
      tpu.vector_store %arg7[%c0_11, %c0_12], %12 {strides = array<i32>} : memref<256x128xf32, #tpu.memory_space<vmem>>, vector<256x128xf32>,
    } else {
    }
    %c0 = arith.constant 0 : index
    %c0_1 = arith.constant 0 : index
    %3 = vector.load %arg7[%c0, %c0_1] : memref<256x128xf32, #tpu.memory_space<vmem>>, vector<256x128xf32>
    %c0_2 = arith.constant 0 : index
    %c0_3 = arith.constant 0 : index
    %4 = vector.load %arg3[%c0_2, %c0_3] : memref<256x128xbf16, #tpu.memory_space<vmem>>, vector<256x128xbf16>
    %c0_4 = arith.constant 0 : index
    %c0_5 = arith.constant 0 : index
    %5 = vector.load %arg4[%c0_4, %c0_5] : memref<128x128xbf16, #tpu.memory_space<vmem>>, vector<128x128xbf16>
    %cst = arith.constant dense<0.000000e+00> : vector<256x128xf32>
    %6 = tpu.matmul %4, %5, %cst {dimension_numbers = #tpu.dot_dimension_numbers<[1], [0], [0], [1], [0, 0, 1, 1], [], []>} : vector<256x128xbf16>, vector<128x128xbf16>, vector<256x128xf32> -> vector<256x128xf32>
    %7 = arith.addf %3, %6 : vector<256x128xf32>
    %c0_6 = arith.constant 0 : index
    %c0_7 = arith.constant 0 : index
    %8 = vector.load %arg7[%c0_6, %c0_7] : memref<256x128xf32, #tpu.memory_space<vmem>>, vector<256x128xf32>
    tpu.vector_store %arg7[%c0_6, %c0_7], %7 {strides = array<i32>} : memref<256x128xf32, #tpu.memory_space<vmem>>, vector<256x128xf32>,
    %c0_i32_8 = arith.constant 0 : i32
    %9 = arith.cmpi eq, %arg2, %c0_i32_8 : i32
    %10 = arith.extui %9 : i1 to i32
    %c0_i32_9 = arith.constant 0 : i32
    %11 = arith.cmpi ne, %10, %c0_i32_9 : i32
    scf.if %11 {
      %c0_10 = arith.constant 0 : index
      %c0_11 = arith.constant 0 : index
      %12 = vector.load %arg7[%c0_10, %c0_11] : memref<256x128xf32, #tpu.memory_space<vmem>>, vector<256x128xf32>
      %c0_12 = arith.constant 0 : index
      %c0_13 = arith.constant 0 : index
      %13 = vector.load %arg5[%c0_12, %c0_13] : memref<1x128xf32, #tpu.memory_space<vmem>>, vector<1x128xf32>
      %14 = vector.broadcast %13 : vector<1x128xf32> to vector<256x128xf32>
      %15 = arith.addf %12, %14 : vector<256x128xf32>
      %cst_14 = arith.constant 0.000000e+00 : f32
      %16 = vector.broadcast %cst_14 : f32 to vector<256x128xf32>
      %17 = arith.maximumf %15, %16 : vector<256x128xf32>
      %18 = arith.truncf %17 : vector<256x128xf32> to vector<256x128xbf16>
      %c0_15 = arith.constant 0 : index
      %c0_16 = arith.constant 0 : index
      %19 = vector.load %arg6[%c0_15, %c0_16] : memref<256x128xbf16, #tpu.memory_space<vmem>>, vector<256x128xbf16>
      tpu.vector_store %arg6[%c0_15, %c0_16], %18 {strides = array<i32>} : memref<256x128xbf16, #tpu.memory_space<vmem>>, vector<256x128xbf16>,
    } else {
    }
    return
  }
  func.func @transform_0(%arg0: i32, %arg1: i32, %arg2: i32) -> (i32, i32) {
    %c0_i32 = arith.constant 0 : i32
    return %arg0, %arg2 : i32, i32
  }
  func.func @transform_1(%arg0: i32, %arg1: i32, %arg2: i32) -> (i32, i32) {
    %c0_i32 = arith.constant 0 : i32
    return %arg2, %arg1 : i32, i32
  }
  func.func @transform_2(%arg0: i32, %arg1: i32, %arg2: i32) -> (i32, i32) {
    %c0_i32 = arith.constant 0 : i32
    %c0_i32_0 = arith.constant 0 : i32
    return %c0_i32, %arg1 : i32, i32
  }
  func.func @transform_3(%arg0: i32, %arg1: i32, %arg2: i32) -> (i32, i32) {
    %c0_i32 = arith.constant 0 : i32
    return %arg0, %arg1 : i32, i32
  }
}

module attributes {stable_mosaic.version = 11 : i64} {
  func.func @_fused_matmul_kernel(%arg0: i32, %arg1: i32, %arg2: i32, %arg3: memref<128x128xbf16, #tpu.memory_space<vmem>>, %arg4: memref<128x128xbf16, #tpu.memory_space<vmem>>, %arg5: memref<1x128xf32, #tpu.memory_space<vmem>>, %arg6: memref<128x128xbf16, #tpu.memory_space<vmem>>, %arg7: memref<128x128xf32, #tpu.memory_space<vmem>>) attributes {dimension_semantics = [#tpu.dimension_semantics<parallel>, #tpu.dimension_semantics<parallel>, #tpu.dimension_semantics<arbitrary>], iteration_bounds = array<i64: 1, 1, 1>, scalar_prefetch = 0 : i64, scratch_operands = 1 : i64, tpu.core_type = #tpu.core_type<tc>, window_params = [{transform_indices = @transform_0, window_bounds = array<i64: 128, 128>}, {transform_indices = @transform_1, window_bounds = array<i64: 128, 128>}, {transform_indices = @transform_2, window_bounds = array<i64: 1, 128>}, {transform_indices = @transform_3, window_bounds = array<i64: 128, 128>}]} {
    %c0_i32 = arith.constant 0 : i32
    %0 = arith.cmpi eq, %arg2, %c0_i32 : i32
    %1 = arith.extui %0 : i1 to i32
    %c0_i32_0 = arith.constant 0 : i32
    %2 = arith.cmpi ne, %1, %c0_i32_0 : i32
    scf.if %2 {
      %cst_10 = arith.constant 0.000000e+00 : f32
      %12 = vector.broadcast %cst_10 : f32 to vector<128x128xf32>
      %c0_11 = arith.constant 0 : index
      %c0_12 = arith.constant 0 : index
      %13 = vector.load %arg7[%c0_11, %c0_12] : memref<128x128xf32, #tpu.memory_space<vmem>>, vector<128x128xf32>
      tpu.vector_store %arg7[%c0_11, %c0_12], %12 {strides = array<i32>} : memref<128x128xf32, #tpu.memory_space<vmem>>, vector<128x128xf32>,
    } else {
    }
    %c0 = arith.constant 0 : index
    %c0_1 = arith.constant 0 : index
    %3 = vector.load %arg7[%c0, %c0_1] : memref<128x128xf32, #tpu.memory_space<vmem>>, vector<128x128xf32>
    %c0_2 = arith.constant 0 : index
    %c0_3 = arith.constant 0 : index
    %4 = vector.load %arg3[%c0_2, %c0_3] : memref<128x128xbf16, #tpu.memory_space<vmem>>, vector<128x128xbf16>
    %c0_4 = arith.constant 0 : index
    %c0_5 = arith.constant 0 : index
    %5 = vector.load %arg4[%c0_4, %c0_5] : memref<128x128xbf16, #tpu.memory_space<vmem>>, vector<128x128xbf16>
    %cst = arith.constant dense<0.000000e+00> : vector<128x128xf32>
    %6 = tpu.matmul %4, %5, %cst {dimension_numbers = #tpu.dot_dimension_numbers<[1], [0], [0], [1], [0, 0, 1, 1], [], []>} : vector<128x128xbf16>, vector<128x128xbf16>, vector<128x128xf32> -> vector<128x128xf32>
    %7 = arith.addf %3, %6 : vector<128x128xf32>
    %c0_6 = arith.constant 0 : index
    %c0_7 = arith.constant 0 : index
    %8 = vector.load %arg7[%c0_6, %c0_7] : memref<128x128xf32, #tpu.memory_space<vmem>>, vector<128x128xf32>
    tpu.vector_store %arg7[%c0_6, %c0_7], %7 {strides = array<i32>} : memref<128x128xf32, #tpu.memory_space<vmem>>, vector<128x128xf32>,
    %c0_i32_8 = arith.constant 0 : i32
    %9 = arith.cmpi eq, %arg2, %c0_i32_8 : i32
    %10 = arith.extui %9 : i1 to i32
    %c0_i32_9 = arith.constant 0 : i32
    %11 = arith.cmpi ne, %10, %c0_i32_9 : i32
    scf.if %11 {
      %c0_10 = arith.constant 0 : index
      %c0_11 = arith.constant 0 : index
      %12 = vector.load %arg7[%c0_10, %c0_11] : memref<128x128xf32, #tpu.memory_space<vmem>>, vector<128x128xf32>
      %c0_12 = arith.constant 0 : index
      %c0_13 = arith.constant 0 : index
      %13 = vector.load %arg5[%c0_12, %c0_13] : memref<1x128xf32, #tpu.memory_space<vmem>>, vector<1x128xf32>
      %14 = vector.broadcast %13 : vector<1x128xf32> to vector<128x128xf32>
      %15 = arith.addf %12, %14 : vector<128x128xf32>
      %cst_14 = arith.constant 0.000000e+00 : f32
      %16 = vector.broadcast %cst_14 : f32 to vector<128x128xf32>
      %17 = arith.maximumf %15, %16 : vector<128x128xf32>
      %18 = arith.truncf %17 : vector<128x128xf32> to vector<128x128xbf16>
      %c0_15 = arith.constant 0 : index
      %c0_16 = arith.constant 0 : index
      %19 = vector.load %arg6[%c0_15, %c0_16] : memref<128x128xbf16, #tpu.memory_space<vmem>>, vector<128x128xbf16>
      tpu.vector_store %arg6[%c0_15, %c0_16], %18 {strides = array<i32>} : memref<128x128xbf16, #tpu.memory_space<vmem>>, vector<128x128xbf16>,
    } else {
    }
    return
  }
  func.func @transform_0(%arg0: i32, %arg1: i32, %arg2: i32) -> (i32, i32) {
    %c0_i32 = arith.constant 0 : i32
    return %arg0, %arg2 : i32, i32
  }
  func.func @transform_1(%arg0: i32, %arg1: i32, %arg2: i32) -> (i32, i32) {
    %c0_i32 = arith.constant 0 : i32
    return %arg2, %arg1 : i32, i32
  }
  func.func @transform_2(%arg0: i32, %arg1: i32, %arg2: i32) -> (i32, i32) {
    %c0_i32 = arith.constant 0 : i32
    %c0_i32_0 = arith.constant 0 : i32
    return %c0_i32, %arg1 : i32, i32
  }
  func.func @transform_3(%arg0: i32, %arg1: i32, %arg2: i32) -> (i32, i32) {
    %c0_i32 = arith.constant 0 : i32
    return %arg0, %arg1 : i32, i32
  }
}

module attributes {stable_mosaic.version = 11 : i64} {
  func.func @_fused_matmul_kernel(%arg0: i32, %arg1: i32, %arg2: i32, %arg3: memref<128x256xbf16, #tpu.memory_space<vmem>>, %arg4: memref<256x128xbf16, #tpu.memory_space<vmem>>, %arg5: memref<1x128xf32, #tpu.memory_space<vmem>>, %arg6: memref<128x128xbf16, #tpu.memory_space<vmem>>, %arg7: memref<128x128xf32, #tpu.memory_space<vmem>>) attributes {dimension_semantics = [#tpu.dimension_semantics<parallel>, #tpu.dimension_semantics<parallel>, #tpu.dimension_semantics<arbitrary>], iteration_bounds = array<i64: 1, 1, 1>, scalar_prefetch = 0 : i64, scratch_operands = 1 : i64, tpu.core_type = #tpu.core_type<tc>, window_params = [{transform_indices = @transform_0, window_bounds = array<i64: 128, 256>}, {transform_indices = @transform_1, window_bounds = array<i64: 256, 128>}, {transform_indices = @transform_2, window_bounds = array<i64: 1, 128>}, {transform_indices = @transform_3, window_bounds = array<i64: 128, 128>}]} {
    %c0_i32 = arith.constant 0 : i32
    %0 = arith.cmpi eq, %arg2, %c0_i32 : i32
    %1 = arith.extui %0 : i1 to i32
    %c0_i32_0 = arith.constant 0 : i32
    %2 = arith.cmpi ne, %1, %c0_i32_0 : i32
    scf.if %2 {
      %cst_10 = arith.constant 0.000000e+00 : f32
      %12 = vector.broadcast %cst_10 : f32 to vector<128x128xf32>
      %c0_11 = arith.constant 0 : index
      %c0_12 = arith.constant 0 : index
      %13 = vector.load %arg7[%c0_11, %c0_12] : memref<128x128xf32, #tpu.memory_space<vmem>>, vector<128x128xf32>
      tpu.vector_store %arg7[%c0_11, %c0_12], %12 {strides = array<i32>} : memref<128x128xf32, #tpu.memory_space<vmem>>, vector<128x128xf32>,
    } else {
    }
    %c0 = arith.constant 0 : index
    %c0_1 = arith.constant 0 : index
    %3 = vector.load %arg7[%c0, %c0_1] : memref<128x128xf32, #tpu.memory_space<vmem>>, vector<128x128xf32>
    %c0_2 = arith.constant 0 : index
    %c0_3 = arith.constant 0 : index
    %4 = vector.load %arg3[%c0_2, %c0_3] : memref<128x256xbf16, #tpu.memory_space<vmem>>, vector<128x256xbf16>
    %c0_4 = arith.constant 0 : index
    %c0_5 = arith.constant 0 : index
    %5 = vector.load %arg4[%c0_4, %c0_5] : memref<256x128xbf16, #tpu.memory_space<vmem>>, vector<256x128xbf16>
    %cst = arith.constant dense<0.000000e+00> : vector<128x128xf32>
    %6 = tpu.matmul %4, %5, %cst {dimension_numbers = #tpu.dot_dimension_numbers<[1], [0], [0], [1], [0, 0, 1, 1], [], []>} : vector<128x256xbf16>, vector<256x128xbf16>, vector<128x128xf32> -> vector<128x128xf32>
    %7 = arith.addf %3, %6 : vector<128x128xf32>
    %c0_6 = arith.constant 0 : index
    %c0_7 = arith.constant 0 : index
    %8 = vector.load %arg7[%c0_6, %c0_7] : memref<128x128xf32, #tpu.memory_space<vmem>>, vector<128x128xf32>
    tpu.vector_store %arg7[%c0_6, %c0_7], %7 {strides = array<i32>} : memref<128x128xf32, #tpu.memory_space<vmem>>, vector<128x128xf32>,
    %c0_i32_8 = arith.constant 0 : i32
    %9 = arith.cmpi eq, %arg2, %c0_i32_8 : i32
    %10 = arith.extui %9 : i1 to i32
    %c0_i32_9 = arith.constant 0 : i32
    %11 = arith.cmpi ne, %10, %c0_i32_9 : i32
    scf.if %11 {
      %c0_10 = arith.constant 0 : index
      %c0_11 = arith.constant 0 : index
      %12 = vector.load %arg7[%c0_10, %c0_11] : memref<128x128xf32, #tpu.memory_space<vmem>>, vector<128x128xf32>
      %c0_12 = arith.constant 0 : index
      %c0_13 = arith.constant 0 : index
      %13 = vector.load %arg5[%c0_12, %c0_13] : memref<1x128xf32, #tpu.memory_space<vmem>>, vector<1x128xf32>
      %14 = vector.broadcast %13 : vector<1x128xf32> to vector<128x128xf32>
      %15 = arith.addf %12, %14 : vector<128x128xf32>
      %cst_14 = arith.constant 0.000000e+00 : f32
      %16 = vector.broadcast %cst_14 : f32 to vector<128x128xf32>
      %17 = arith.maximumf %15, %16 : vector<128x128xf32>
      %18 = arith.truncf %17 : vector<128x128xf32> to vector<128x128xbf16>
      %c0_15 = arith.constant 0 : index
      %c0_16 = arith.constant 0 : index
      %19 = vector.load %arg6[%c0_15, %c0_16] : memref<128x128xbf16, #tpu.memory_space<vmem>>, vector<128x128xbf16>
      tpu.vector_store %arg6[%c0_15, %c0_16], %18 {strides = array<i32>} : memref<128x128xbf16, #tpu.memory_space<vmem>>, vector<128x128xbf16>,
    } else {
    }
    return
  }
  func.func @transform_0(%arg0: i32, %arg1: i32, %arg2: i32) -> (i32, i32) {
    %c0_i32 = arith.constant 0 : i32
    return %arg0, %arg2 : i32, i32
  }
  func.func @transform_1(%arg0: i32, %arg1: i32, %arg2: i32) -> (i32, i32) {
    %c0_i32 = arith.constant 0 : i32
    return %arg2, %arg1 : i32, i32
  }
  func.func @transform_2(%arg0: i32, %arg1: i32, %arg2: i32) -> (i32, i32) {
    %c0_i32 = arith.constant 0 : i32
    %c0_i32_0 = arith.constant 0 : i32
    return %c0_i32, %arg1 : i32, i32
  }
  func.func @transform_3(%arg0: i32, %arg1: i32, %arg2: i32) -> (i32, i32) {
    %c0_i32 = arith.constant 0 : i32
    return %arg0, %arg1 : i32, i32
  }
}

module attributes {stable_mosaic.version = 11 : i64} {
  func.func @_fused_matmul_kernel(%arg0: i32, %arg1: i32, %arg2: i32, %arg3: memref<128x128xbf16, #tpu.memory_space<vmem>>, %arg4: memref<128x128xbf16, #tpu.memory_space<vmem>>, %arg5: memref<1x128xf32, #tpu.memory_space<vmem>>, %arg6: memref<128x128xbf16, #tpu.memory_space<vmem>>, %arg7: memref<128x128xf32, #tpu.memory_space<vmem>>, %arg8: memref<128x128xf32, #tpu.memory_space<vmem>>) attributes {dimension_semantics = [#tpu.dimension_semantics<parallel>, #tpu.dimension_semantics<parallel>, #tpu.dimension_semantics<arbitrary>], iteration_bounds = array<i64: 1, 1, 1>, scalar_prefetch = 0 : i64, scratch_operands = 1 : i64, tpu.core_type = #tpu.core_type<tc>, window_params = [{transform_indices = @transform_0, window_bounds = array<i64: 128, 128>}, {transform_indices = @transform_1, window_bounds = array<i64: 128, 128>}, {transform_indices = @transform_2, window_bounds = array<i64: 1, 128>}, {transform_indices = @transform_3, window_bounds = array<i64: 128, 128>}, {transform_indices = @transform_4, window_bounds = array<i64: 128, 128>}]} {
    %c0_i32 = arith.constant 0 : i32
    %0 = arith.cmpi eq, %arg2, %c0_i32 : i32
    %1 = arith.extui %0 : i1 to i32
    %c0_i32_0 = arith.constant 0 : i32
    %2 = arith.cmpi ne, %1, %c0_i32_0 : i32
    scf.if %2 {
      %cst_10 = arith.constant 0.000000e+00 : f32
      %12 = vector.broadcast %cst_10 : f32 to vector<128x128xf32>
      %c0_11 = arith.constant 0 : index
      %c0_12 = arith.constant 0 : index
      %13 = vector.load %arg8[%c0_11, %c0_12] : memref<128x128xf32, #tpu.memory_space<vmem>>, vector<128x128xf32>
      tpu.vector_store %arg8[%c0_11, %c0_12], %12 {strides = array<i32>} : memref<128x128xf32, #tpu.memory_space<vmem>>, vector<128x128xf32>,
    } else {
    }
    %c0 = arith.constant 0 : index
    %c0_1 = arith.constant 0 : index
    %3 = vector.load %arg8[%c0, %c0_1] : memref<128x128xf32, #tpu.memory_space<vmem>>, vector<128x128xf32>
    %c0_2 = arith.constant 0 : index
    %c0_3 = arith.constant 0 : index
    %4 = vector.load %arg3[%c0_2, %c0_3] : memref<128x128xbf16, #tpu.memory_space<vmem>>, vector<128x128xbf16>
    %c0_4 = arith.constant 0 : index
    %c0_5 = arith.constant 0 : index
    %5 = vector.load %arg4[%c0_4, %c0_5] : memref<128x128xbf16, #tpu.memory_space<vmem>>, vector<128x128xbf16>
    %cst = arith.constant dense<0.000000e+00> : vector<128x128xf32>
    %6 = tpu.matmul %4, %5, %cst {dimension_numbers = #tpu.dot_dimension_numbers<[1], [0], [0], [1], [0, 0, 1, 1], [], []>} : vector<128x128xbf16>, vector<128x128xbf16>, vector<128x128xf32> -> vector<128x128xf32>
    %7 = arith.addf %3, %6 : vector<128x128xf32>
    %c0_6 = arith.constant 0 : index
    %c0_7 = arith.constant 0 : index
    %8 = vector.load %arg8[%c0_6, %c0_7] : memref<128x128xf32, #tpu.memory_space<vmem>>, vector<128x128xf32>
    tpu.vector_store %arg8[%c0_6, %c0_7], %7 {strides = array<i32>} : memref<128x128xf32, #tpu.memory_space<vmem>>, vector<128x128xf32>,
    %c0_i32_8 = arith.constant 0 : i32
    %9 = arith.cmpi eq, %arg2, %c0_i32_8 : i32
    %10 = arith.extui %9 : i1 to i32
    %c0_i32_9 = arith.constant 0 : i32
    %11 = arith.cmpi ne, %10, %c0_i32_9 : i32
    scf.if %11 {
      %c0_10 = arith.constant 0 : index
      %c0_11 = arith.constant 0 : index
      %12 = vector.load %arg8[%c0_10, %c0_11] : memref<128x128xf32, #tpu.memory_space<vmem>>, vector<128x128xf32>
      %c0_12 = arith.constant 0 : index
      %c0_13 = arith.constant 0 : index
      %13 = vector.load %arg5[%c0_12, %c0_13] : memref<1x128xf32, #tpu.memory_space<vmem>>, vector<1x128xf32>
      %14 = vector.broadcast %13 : vector<1x128xf32> to vector<128x128xf32>
      %15 = arith.addf %12, %14 : vector<128x128xf32>
      %c0_14 = arith.constant 0 : index
      %c0_15 = arith.constant 0 : index
      %16 = vector.load %arg6[%c0_14, %c0_15] : memref<128x128xbf16, #tpu.memory_space<vmem>>, vector<128x128xbf16>
      %17 = arith.extf %16 : vector<128x128xbf16> to vector<128x128xf32>
      %18 = arith.addf %15, %17 : vector<128x128xf32>
      %cst_16 = arith.constant 0.000000e+00 : f32
      %19 = vector.broadcast %cst_16 : f32 to vector<128x128xf32>
      %20 = arith.maximumf %18, %19 : vector<128x128xf32>
      %c0_17 = arith.constant 0 : index
      %c0_18 = arith.constant 0 : index
      %21 = vector.load %arg7[%c0_17, %c0_18] : memref<128x128xf32, #tpu.memory_space<vmem>>, vector<128x128xf32>
      tpu.vector_store %arg7[%c0_17, %c0_18], %20 {strides = array<i32>} : memref<128x128xf32, #tpu.memory_space<vmem>>, vector<128x128xf32>,
    } else {
    }
    return
  }
  func.func @transform_0(%arg0: i32, %arg1: i32, %arg2: i32) -> (i32, i32) {
    %c0_i32 = arith.constant 0 : i32
    return %arg0, %arg2 : i32, i32
  }
  func.func @transform_1(%arg0: i32, %arg1: i32, %arg2: i32) -> (i32, i32) {
    %c0_i32 = arith.constant 0 : i32
    return %arg2, %arg1 : i32, i32
  }
  func.func @transform_2(%arg0: i32, %arg1: i32, %arg2: i32) -> (i32, i32) {
    %c0_i32 = arith.constant 0 : i32
    %c0_i32_0 = arith.constant 0 : i32
    return %c0_i32, %arg1 : i32, i32
  }
  func.func @transform_3(%arg0: i32, %arg1: i32, %arg2: i32) -> (i32, i32) {
    %c0_i32 = arith.constant 0 : i32
    return %arg0, %arg1 : i32, i32
  }
  func.func @transform_4(%arg0: i32, %arg1: i32, %arg2: i32) -> (i32, i32) {
    %c0_i32 = arith.constant 0 : i32
    return %arg0, %arg1 : i32, i32
  }
}

</mosaic_0001>

<llo_original>
// kernel: bottleneck_forward.6
$region0: #{bottleneck_forward.6}
  #allocation0 [shape = 'u32[]', space=smem, size = 0x4, offset = 0x4, fixed_abs, tag = 'smem constant byte address 0x4 - core index']
  #allocation1 [shape = 'u32[144,128]{1,0:T(1,128)}', space=vmem, size = 0x12000, scoped, tag = 'internal scratch']
  #allocation2 [shape = 'f32[256,128]{1,0:T(8,128)}', space=vmem, size = 0x20000, scoped, tag = 'scratch operand']
  %s0 = inlined_call_operand.vmem [shape: bf16[512,128], index: 0, kind: input, shape index: {}]
  %s1 = inlined_call_operand.vmem [shape: bf16[128,128], index: 1, kind: input, shape index: {}]
  %s2 = inlined_call_operand.vmem [shape: f32[1,128], index: 2, kind: input, shape index: {}]
  %s3 = inlined_call_operand.vmem [shape: bf16[512,128], index: 3, kind: output, shape index: {}]
  %s4 = sld [smem:[#allocation0]]
  $region53: #{bottleneck_forward.6} parent=0
    _
  %s6 = ssub.s32 1, %s4
  %s7 = scalar_select 0, %s6, %s4
  loop: start=0, step=1, limit=4
  $region2: #{bottleneck_forward.6} parent=0 // loop_pre_header
    _
  $region3: #{bottleneck_forward.6} parent=0 // loop_header
    %s9 = sphi 0, %s13
    %p10 = scmp.ge.s32.totalorder %s9, 4
    %s16 = sphi 0, %s35
    %s17 = sphi 0, %s31
    %s18 = sphi 0, %s27
    %s19 = sphi 0, %s16
    %s20 = sphi 0, %s17
    %s21 = sphi 0, %s18
    %s22 = sphi 0, %s19
    %s23 = sphi 0, %s20
    %s24 = sphi 0, %s21
    %s40 = sphi 0, %s42
    %s43 = sphi 0, %s40
    %s44 = sphi 0, %s43
    %s60 = sphi 0, %s44
    %s68 = sphi 0, %s70
    %s71 = sphi 0, %s68
    %s72 = sphi 0, %s71
    %s88 = sphi 0, %s72
    %s94 = sphi 0, %s96
    %s97 = sphi 0, %s94
    %s98 = sphi 0, %s97
    %s114 = sphi 0, %s98
    %s122 = sphi 0, %s124
    %s125 = sphi 0, %s122
    %s126 = sphi 0, %s125
    %s142 = sphi 0, %s126
  $region4: #{bottleneck_forward.6} parent=0 // loop_header_branch
    %12 = sbr.rel (%p10) target = $region8
  $region5: #{bottleneck_forward.6} parent=0 // loop_body
    %s14 = ssub.s32 %s9, 1
    %s15 = ssub.s32 %s9, 2
    %s25 = sadd.s32 1, %s18
    %p26 = scmp.ge.s32.totalorder %s25, 1
    %s27 = scalar_select %p26, 0, %s25
    %s28 = sadd.s32 1, %s17
    %s29 = scalar_select %p26, %s28, %s17
    %p30 = scmp.ge.s32.totalorder %s29, 1
    %s31 = scalar_select %p30, 0, %s29
    %s32 = sadd.s32 1, %s16
    %s33 = scalar_select %p30, %s32, %s16
    %p34 = scmp.ge.s32.totalorder %s33, 2
    %s35 = scalar_select %p34, 0, %s33
    %s36 = ssub.s32 %s16, %s35
    %s37 = ssub.s32 %s18, %s27
    %s38 = sor.u32 %s36, %s37
    %p39 = scmp.eq.s32.totalorder %s38, 0
    %s41 = sadd.s32 %s40, 1
    %s42 = scalar_select %p39, %s40, %s41
    %p45 = pneg %p39
    %p46 = scmp.eq.s32.totalorder %s9, 1
    %p47 = por %p45, %p46
    %p48 = scmp.ne.s32.totalorder %s40, %s43
    %p49 = scmp.eq.s32.totalorder %s9, 0
    %p50 = por %p48, %p49
    %p51 = scmp.ne.s32.totalorder %s40, %s43
    %p52 = scmp.eq.s32.totalorder %s14, 1
    %p53 = por %p51, %p52
    %p54 = scmp.ne.s32.totalorder %s43, %s44
    %p55 = scmp.eq.s32.totalorder %s14, 0
    %p56 = por %p54, %p55
    %p57 = scmp.ne.s32.totalorder %s43, %s44
    %p58 = scmp.eq.s32.totalorder %s15, 1
    %p59 = por %p57, %p58
    %p61 = scmp.ne.s32.totalorder %s44, %s60
    %p62 = scmp.eq.s32.totalorder %s15, 0
    %p63 = por %p61, %p62
    %s64 = ssub.s32 %s18, %s27
    %s65 = ssub.s32 %s17, %s31
    %s66 = sor.u32 %s64, %s65
    %p67 = scmp.eq.s32.totalorder %s66, 0
    %s69 = sadd.s32 %s68, 1
    %s70 = scalar_select %p67, %s68, %s69
    %p73 = pneg %p67
    %p74 = scmp.eq.s32.totalorder %s9, 1
    %p75 = por %p73, %p74
    %p76 = scmp.ne.s32.totalorder %s68, %s71
    %p77 = scmp.eq.s32.totalorder %s9, 0
    %p78 = por %p76, %p77
    %p79 = scmp.ne.s32.totalorder %s68, %s71
    %p80 = scmp.eq.s32.totalorder %s14, 1
    %p81 = por %p79, %p80
    %p82 = scmp.ne.s32.totalorder %s71, %s72
    %p83 = scmp.eq.s32.totalorder %s14, 0
    %p84 = por %p82, %p83
    %p85 = scmp.ne.s32.totalorder %s71, %s72
    %p86 = scmp.eq.s32.totalorder %s15, 1
    %p87 = por %p85, %p86
    %p89 = scmp.ne.s32.totalorder %s72, %s88
    %p90 = scmp.eq.s32.totalorder %s15, 0
    %p91 = por %p89, %p90
    %s92 = ssub.s32 %s17, %s31
    %p93 = scmp.eq.s32.totalorder %s92, 0
    %s95 = sadd.s32 %s94, 1
    %s96 = scalar_select %p93, %s94, %s95
    %p99 = pneg %p93
    %p100 = scmp.eq.s32.totalorder %s9, 1
    %p101 = por %p99, %p100
    %p102 = scmp.ne.s32.totalorder %s94, %s97
    %p103 = scmp.eq.s32.totalorder %s9, 0
    %p104 = por %p102, %p103
    %p105 = scmp.ne.s32.totalorder %s94, %s97
    %p106 = scmp.eq.s32.totalorder %s14, 1
    %p107 = por %p105, %p106
    %p108 = scmp.ne.s32.totalorder %s97, %s98
    %p109 = scmp.eq.s32.totalorder %s14, 0
    %p110 = por %p108, %p109
    %p111 = scmp.ne.s32.totalorder %s97, %s98
    %p112 = scmp.eq.s32.totalorder %s15, 1
    %p113 = por %p111, %p112
    %p115 = scmp.ne.s32.totalorder %s98, %s114
    %p116 = scmp.eq.s32.totalorder %s15, 0
    %p117 = por %p115, %p116
    %s118 = ssub.s32 %s16, %s35
    %s119 = ssub.s32 %s17, %s31
    %s120 = sor.u32 %s118, %s119
    %p121 = scmp.eq.s32.totalorder %s120, 0
    %s123 = sadd.s32 %s122, 1
    %s124 = scalar_select %p121, %s122, %s123
    %p127 = pneg %p121
    %p128 = scmp.eq.s32.totalorder %s9, 1
    %p129 = por %p127, %p128
    %p130 = scmp.ne.s32.totalorder %s122, %s125
    %p131 = scmp.eq.s32.totalorder %s9, 0
    %p132 = por %p130, %p131
    %p133 = scmp.ne.s32.totalorder %s122, %s125
    %p134 = scmp.eq.s32.totalorder %s14, 1
    %p135 = por %p133, %p134
    %p136 = scmp.ne.s32.totalorder %s125, %s126
    %p137 = scmp.eq.s32.totalorder %s14, 0
    %p138 = por %p136, %p137
    %p139 = scmp.ne.s32.totalorder %s125, %s126
    %p140 = scmp.eq.s32.totalorder %s15, 1
    %p141 = por %p139, %p140
    %p143 = scmp.ne.s32.totalorder %s126, %s142
    %p144 = scmp.eq.s32.totalorder %s15, 0
    %p145 = por %p143, %p144
    %p146 = scmp.le.s32.totalorder 1, %s9
    %p147 = scmp.lt.s32.totalorder %s9, 3
    %p148 = pnand %p146, %p147
    %p149 = pneg %p148
    // Predicated region
    $region9: #{bottleneck_forward.6} parent=5 // pred_check
      _
    $region10: #{bottleneck_forward.6} parent=5 // pred_check_branch
      %151 = sbr.rel (%p148) target = $region12
    $region11: #{bottleneck_forward.6} parent=5 // pred_region
      %s152 = ssub.s32 %s9, 1
      // Predicated region
      $region13: #{bottleneck_forward.6} parent=11 // pred_check
        %p153 = pneg %p84
      $region14: #{bottleneck_forward.6} parent=11 // pred_check_branch
        %155 = sbr.rel (%p153) target = $region16
      $region15: #{bottleneck_forward.6} parent=11 // pred_region
        %s156 = smul.u32 16, %s21
        %p157 = scmp.lt.s32.totalorder %s156, 15
        %s158 = scalar_select %p157, %s156, 15
        %p159 = scmp.lt.s32.totalorder %s20, 0
        %s160 = scalar_select %p159, %s20, 0
        %s161 = sadd.s32 %s160, %s158
        %s162 = smul.addr %s161, 4
        %s163 = scalar_lea.vmem %s1, %s162
        %s164 = smul.u32 16, %s21
      $region16: #{bottleneck_forward.6} parent=11 // pred_fallthru
        _
      // Predicated region
      $region17: #{bottleneck_forward.6} parent=11 // pred_check
        %p165 = pneg %p110
      $region18: #{bottleneck_forward.6} parent=11 // pred_check_branch
        %167 = sbr.rel (%p165) target = $region20
      $region19: #{bottleneck_forward.6} parent=11 // pred_region
        %p168 = scmp.lt.s32.totalorder %s20, 0
        %s169 = scalar_select %p168, %s20, 0
        %s170 = scalar_lea.vmem %s2, %s169
      $region20: #{bottleneck_forward.6} parent=11 // pred_fallthru
        _
    $region12: #{bottleneck_forward.6} parent=5 // pred_fallthru
      _
    %p171 = scmp.lt.s32.totalorder %s9, 2
    // Predicated region
    $region21: #{bottleneck_forward.6} parent=5 // pred_check
      %p172 = pneg %p171
    $region22: #{bottleneck_forward.6} parent=5 // pred_check_branch
      %174 = sbr.rel (%p172) target = $region24
    $region23: #{bottleneck_forward.6} parent=5 // pred_region
      // Predicated region
      $region25: #{bottleneck_forward.6} parent=23 // pred_check
        %p175 = pneg %p50
      $region26: #{bottleneck_forward.6} parent=23 // pred_check_branch
        %177 = sbr.rel (%p175) target = $region28
      $region27: #{bottleneck_forward.6} parent=23 // pred_region
        %s178 = smul.u32 32, %s16
        %p179 = scmp.lt.s32.totalorder %s178, 63
        %s180 = scalar_select %p179, %s178, 63
        %p181 = scmp.lt.s32.totalorder %s18, 0
        %s182 = scalar_select %p181, %s18, 0
        %s183 = sadd.s32 %s182, %s180
        %s184 = smul.addr %s183, 4
        %s185 = scalar_lea.vmem %s0, %s184
        %s186 = smul.u32 32, %s16
      $region28: #{bottleneck_forward.6} parent=23 // pred_fallthru
        _
    $region24: #{bottleneck_forward.6} parent=5 // pred_fallthru
      _
    %p187 = scmp.le.s32.totalorder 1, %s9
    %p188 = scmp.lt.s32.totalorder %s9, 3
    %p189 = pnand %p187, %p188
    %p190 = pneg %p189
    // Predicated region
    $region29: #{bottleneck_forward.6} parent=5 // pred_check
      _
    $region30: #{bottleneck_forward.6} parent=5 // pred_check_branch
      %192 = sbr.rel (%p189) target = $region32
    $region31: #{bottleneck_forward.6} parent=5 // pred_region
      %s193 = ssub.s32 %s9, 1
      %s194 = smul.u32 32, %s19
      %p195 = scmp.lt.s32.totalorder %s194, 63
      %s196 = scalar_select %p195, %s194, 63
      %p197 = scmp.lt.s32.totalorder %s21, 0
      %s198 = scalar_select %p197, %s21, 0
      %s199 = sadd.s32 %s198, %s196
      %s200 = smul.addr %s199, 4
      %s201 = scalar_lea.vmem %s0, %s200
      %p202 = pneg %p56
      %p203 = pneg %p53
      %s204 = smul.u32 16, %s21
      %p205 = scmp.lt.s32.totalorder %s204, 15
      %s206 = scalar_select %p205, %s204, 15
      %p207 = scmp.lt.s32.totalorder %s20, 0
      %s208 = scalar_select %p207, %s20, 0
      %s209 = sadd.s32 %s208, %s206
      %s210 = smul.addr %s209, 4
      %s211 = scalar_lea.vmem %s1, %s210
      %p212 = pneg %p84
      %p213 = pneg %p81
      %p214 = scmp.lt.s32.totalorder %s20, 0
      %s215 = scalar_select %p214, %s20, 0
      %s216 = scalar_lea.vmem %s2, %s215
      %p217 = pneg %p110
      %p218 = pneg %p107
      %p219 = pneg %p138
      %p220 = pneg %p135
      %s221 = smul.u32 32, %s19
      %p222 = scmp.lt.s32.totalorder %s221, 63
      %s223 = scalar_select %p222, %s221, 63
      %p224 = scmp.lt.s32.totalorder %s20, 0
      %s225 = scalar_select %p224, %s20, 0
      %s226 = sadd.s32 %s225, %s223
      %s227 = smul.addr %s226, 4
      %s228 = scalar_lea.vmem %s3, %s227
      %s229 = smul.u32 32, %s19
      %p230 = scmp.lt.s32.totalorder %s229, 63
      %s231 = scalar_select %p230, %s229, 63
      %p232 = scmp.lt.s32.totalorder %s21, 0
      %s233 = scalar_select %p232, %s21, 0
      %s234 = sadd.s32 %s233, %s231
      %s235 = smul.addr %s234, 4
      %s236 = scalar_lea.vmem %s0, %s235
      %s237 = smul.u32 32, %s19
      %s238 = smul.u32 16, %s21
      %p239 = scmp.lt.s32.totalorder %s238, 15
      %s240 = scalar_select %p239, %s238, 15
      %p241 = scmp.lt.s32.totalorder %s20, 0
      %s242 = scalar_select %p241, %s20, 0
      %s243 = sadd.s32 %s242, %s240
      %s244 = smul.addr %s243, 4
      %s245 = scalar_lea.vmem %s1, %s244
      %s246 = smul.u32 16, %s21
      %p247 = scmp.lt.s32.totalorder %s20, 0
      %s248 = scalar_select %p247, %s20, 0
      %s249 = scalar_lea.vmem %s2, %s248
      %s250 = smul.u32 32, %s19
      %p251 = scmp.lt.s32.totalorder %s250, 63
      %s252 = scalar_select %p251, %s250, 63
      %p253 = scmp.lt.s32.totalorder %s20, 0
      %s254 = scalar_select %p253, %s20, 0
      %s255 = sadd.s32 %s254, %s252
      %s256 = smul.addr %s255, 4
      %s257 = scalar_lea.vmem %s3, %s256
      %s258 = smul.u32 32, %s19
      %p260 = scmp.eq.s32.totalorder %s21, 0
      // Predicated region
      $region33: #{bottleneck_forward.6} parent=31 // pred_check
        %p261 = pneg %p260
      $region34: #{bottleneck_forward.6} parent=31 // pred_check_branch
        %263 = sbr.rel (%p261) target = $region36
      $region35: #{bottleneck_forward.6} parent=31 // pred_region
        %264 = vst [vmem:[#allocation2] sm:$0xff] 0.0
        %265 = vst [vmem:[#allocation2 + $0x8] sm:$0xff] 0.0
        %266 = vst [vmem:[#allocation2 + $0x10] sm:$0xff] 0.0
        %267 = vst [vmem:[#allocation2 + $0x18] sm:$0xff] 0.0
        %268 = vst [vmem:[#allocation2 + $0x20] sm:$0xff] 0.0
        %269 = vst [vmem:[#allocation2 + $0x28] sm:$0xff] 0.0
        %270 = vst [vmem:[#allocation2 + $0x30] sm:$0xff] 0.0
        %271 = vst [vmem:[#allocation2 + $0x38] sm:$0xff] 0.0
        %272 = vst [vmem:[#allocation2 + $0x40] sm:$0xff] 0.0
        %273 = vst [vmem:[#allocation2 + $0x48] sm:$0xff] 0.0
        %274 = vst [vmem:[#allocation2 + $0x50] sm:$0xff] 0.0
        %275 = vst [vmem:[#allocation2 + $0x58] sm:$0xff] 0.0
        %276 = vst [vmem:[#allocation2 + $0x60] sm:$0xff] 0.0
        %277 = vst [vmem:[#allocation2 + $0x68] sm:$0xff] 0.0
        %278 = vst [vmem:[#allocation2 + $0x70] sm:$0xff] 0.0
        %279 = vst [vmem:[#allocation2 + $0x78] sm:$0xff] 0.0
        %280 = vst [vmem:[#allocation2 + $0x80] sm:$0xff] 0.0
        %281 = vst [vmem:[#allocation2 + $0x88] sm:$0xff] 0.0
        %282 = vst [vmem:[#allocation2 + $0x90] sm:$0xff] 0.0
        %283 = vst [vmem:[#allocation2 + $0x98] sm:$0xff] 0.0
        %284 = vst [vmem:[#allocation2 + $0xa0] sm:$0xff] 0.0
        %285 = vst [vmem:[#allocation2 + $0xa8] sm:$0xff] 0.0
        %286 = vst [vmem:[#allocation2 + $0xb0] sm:$0xff] 0.0
        %287 = vst [vmem:[#allocation2 + $0xb8] sm:$0xff] 0.0
        %288 = vst [vmem:[#allocation2 + $0xc0] sm:$0xff] 0.0
        %289 = vst [vmem:[#allocation2 + $0xc8] sm:$0xff] 0.0
        %290 = vst [vmem:[#allocation2 + $0xd0] sm:$0xff] 0.0
        %291 = vst [vmem:[#allocation2 + $0xd8] sm:$0xff] 0.0
        %292 = vst [vmem:[#allocation2 + $0xe0] sm:$0xff] 0.0
        %293 = vst [vmem:[#allocation2 + $0xe8] sm:$0xff] 0.0
        %294 = vst [vmem:[#allocation2 + $0xf0] sm:$0xff] 0.0
        %295 = vst [vmem:[#allocation2 + $0xf8] sm:$0xff] 0.0
      $region36: #{bottleneck_forward.6} parent=31 // pred_fallthru
        _
      %v296 = vld [vmem:[#allocation2] sm:$0xff]
      %v297 = vld [vmem:[#allocation2 + $0x8] sm:$0xff]
      %v298 = vld [vmem:[#allocation2 + $0x10] sm:$0xff]
      %v299 = vld [vmem:[#allocation2 + $0x18] sm:$0xff]
      %v300 = vld [vmem:[#allocation2 + $0x20] sm:$0xff]
      %v301 = vld [vmem:[#allocation2 + $0x28] sm:$0xff]
      %v302 = vld [vmem:[#allocation2 + $0x30] sm:$0xff]
      %v303 = vld [vmem:[#allocation2 + $0x38] sm:$0xff]
      %v304 = vld [vmem:[#allocation2 + $0x40] sm:$0xff]
      %v305 = vld [vmem:[#allocation2 + $0x48] sm:$0xff]
      %v306 = vld [vmem:[#allocation2 + $0x50] sm:$0xff]
      %v307 = vld [vmem:[#allocation2 + $0x58] sm:$0xff]
      %v308 = vld [vmem:[#allocation2 + $0x60] sm:$0xff]
      %v309 = vld [vmem:[#allocation2 + $0x68] sm:$0xff]
      %v310 = vld [vmem:[#allocation2 + $0x70] sm:$0xff]
      %v311 = vld [vmem:[#allocation2 + $0x78] sm:$0xff]
      %v312 = vld [vmem:[#allocation2 + $0x80] sm:$0xff]
      %v313 = vld [vmem:[#allocation2 + $0x88] sm:$0xff]
      %v314 = vld [vmem:[#allocation2 + $0x90] sm:$0xff]
      %v315 = vld [vmem:[#allocation2 + $0x98] sm:$0xff]
      %v316 = vld [vmem:[#allocation2 + $0xa0] sm:$0xff]
      %v317 = vld [vmem:[#allocation2 + $0xa8] sm:$0xff]
      %v318 = vld [vmem:[#allocation2 + $0xb0] sm:$0xff]
      %v319 = vld [vmem:[#allocation2 + $0xb8] sm:$0xff]
      %v320 = vld [vmem:[#allocation2 + $0xc0] sm:$0xff]
      %v321 = vld [vmem:[#allocation2 + $0xc8] sm:$0xff]
      %v322 = vld [vmem:[#allocation2 + $0xd0] sm:$0xff]
      %v323 = vld [vmem:[#allocation2 + $0xd8] sm:$0xff]
      %v324 = vld [vmem:[#allocation2 + $0xe0] sm:$0xff]
      %v325 = vld [vmem:[#allocation2 + $0xe8] sm:$0xff]
      %v326 = vld [vmem:[#allocation2 + $0xf0] sm:$0xff]
      %v327 = vld [vmem:[#allocation2 + $0xf8] sm:$0xff]
      %v328 = vld [vmem:[%s236] sm:$0xf]
      %v329 = vld [vmem:[%s236 + $0x4] sm:$0xf]
      %v330 = vld [vmem:[%s236 + $0x8] sm:$0xf]
      %v331 = vld [vmem:[%s236 + $0xc] sm:$0xf]
      %v332 = vld [vmem:[%s236 + $0x10] sm:$0xf]
      %v333 = vld [vmem:[%s236 + $0x14] sm:$0xf]
      %v334 = vld [vmem:[%s236 + $0x18] sm:$0xf]
      %v335 = vld [vmem:[%s236 + $0x1c] sm:$0xf]
      %v336 = vld [vmem:[%s236 + $0x20] sm:$0xf]
      %v337 = vld [vmem:[%s236 + $0x24] sm:$0xf]
      %v338 = vld [vmem:[%s236 + $0x28] sm:$0xf]
      %v339 = vld [vmem:[%s236 + $0x2c] sm:$0xf]
      %v340 = vld [vmem:[%s236 + $0x30] sm:$0xf]
      %v341 = vld [vmem:[%s236 + $0x34] sm:$0xf]
      %v342 = vld [vmem:[%s236 + $0x38] sm:$0xf]
      %v343 = vld [vmem:[%s236 + $0x3c] sm:$0xf]
      %v344 = vld [vmem:[%s236 + $0x40] sm:$0xf]
      %v345 = vld [vmem:[%s236 + $0x44] sm:$0xf]
      %v346 = vld [vmem:[%s236 + $0x48] sm:$0xf]
      %v347 = vld [vmem:[%s236 + $0x4c] sm:$0xf]
      %v348 = vld [vmem:[%s236 + $0x50] sm:$0xf]
      %v349 = vld [vmem:[%s236 + $0x54] sm:$0xf]
      %v350 = vld [vmem:[%s236 + $0x58] sm:$0xf]
      %v351 = vld [vmem:[%s236 + $0x5c] sm:$0xf]
      %v352 = vld [vmem:[%s236 + $0x60] sm:$0xf]
      %v353 = vld [vmem:[%s236 + $0x64] sm:$0xf]
      %v354 = vld [vmem:[%s236 + $0x68] sm:$0xf]
      %v355 = vld [vmem:[%s236 + $0x6c] sm:$0xf]
      %v356 = vld [vmem:[%s236 + $0x70] sm:$0xf]
      %v357 = vld [vmem:[%s236 + $0x74] sm:$0xf]
      %v358 = vld [vmem:[%s236 + $0x78] sm:$0xf]
      %v359 = vld [vmem:[%s236 + $0x7c] sm:$0xf]
      %v360 = vld [vmem:[%s245] sm:$0xf]
      %v361 = vld [vmem:[%s245 + $0x4] sm:$0xf]
      %v362 = vld [vmem:[%s245 + $0x8] sm:$0xf]
      %v363 = vld [vmem:[%s245 + $0xc] sm:$0xf]
      %v364 = vld [vmem:[%s245 + $0x10] sm:$0xf]
      %v365 = vld [vmem:[%s245 + $0x14] sm:$0xf]
      %v366 = vld [vmem:[%s245 + $0x18] sm:$0xf]
      %v367 = vld [vmem:[%s245 + $0x1c] sm:$0xf]
      %v368 = vld [vmem:[%s245 + $0x20] sm:$0xf]
      %v369 = vld [vmem:[%s245 + $0x24] sm:$0xf]
      %v370 = vld [vmem:[%s245 + $0x28] sm:$0xf]
      %v371 = vld [vmem:[%s245 + $0x2c] sm:$0xf]
      %v372 = vld [vmem:[%s245 + $0x30] sm:$0xf]
      %v373 = vld [vmem:[%s245 + $0x34] sm:$0xf]
      %v374 = vld [vmem:[%s245 + $0x38] sm:$0xf]
      %v375 = vld [vmem:[%s245 + $0x3c] sm:$0xf]
      %v408 = vunpack.c.l.b16 %v328
      %v409 = vunpack.c.l.b16 %v329
      %v410 = vunpack.c.l.b16 %v330
      %v411 = vunpack.c.l.b16 %v331
      %v412 = vunpack.c.l.b16 %v332
      %v413 = vunpack.c.l.b16 %v333
      %v414 = vunpack.c.l.b16 %v334
      %v415 = vunpack.c.l.b16 %v335
      %v416 = vunpack.c.l.b16 %v336
      %v417 = vunpack.c.l.b16 %v337
      %v418 = vunpack.c.l.b16 %v338
      %v419 = vunpack.c.l.b16 %v339
      %v420 = vunpack.c.l.b16 %v340
      %v421 = vunpack.c.l.b16 %v341
      %v422 = vunpack.c.l.b16 %v342
      %v423 = vunpack.c.l.b16 %v343
      %v424 = vunpack.c.l.b16 %v344
      %v425 = vunpack.c.l.b16 %v345
      %v426 = vunpack.c.l.b16 %v346
      %v427 = vunpack.c.l.b16 %v347
      %v428 = vunpack.c.l.b16 %v348
      %v429 = vunpack.c.l.b16 %v349
      %v430 = vunpack.c.l.b16 %v350
      %v431 = vunpack.c.l.b16 %v351
      %v432 = vunpack.c.l.b16 %v352
      %v433 = vunpack.c.l.b16 %v353
      %v434 = vunpack.c.l.b16 %v354
      %v435 = vunpack.c.l.b16 %v355
      %v436 = vunpack.c.l.b16 %v356
      %v437 = vunpack.c.l.b16 %v357
      %v438 = vunpack.c.l.b16 %v358
      %v439 = vunpack.c.l.b16 %v359
      %v440 = vpack.c.b16 %v409, %v408
      %v441 = vpack.c.b16 %v411, %v410
      %v442 = vpack.c.b16 %v413, %v412
      %v443 = vpack.c.b16 %v415, %v414
      %v444 = vpack.c.b16 %v417, %v416
      %v445 = vpack.c.b16 %v419, %v418
      %v446 = vpack.c.b16 %v421, %v420
      %v447 = vpack.c.b16 %v423, %v422
      %v448 = vpack.c.b16 %v425, %v424
      %v449 = vpack.c.b16 %v427, %v426
      %v450 = vpack.c.b16 %v429, %v428
      %v451 = vpack.c.b16 %v431, %v430
      %v452 = vpack.c.b16 %v433, %v432
      %v453 = vpack.c.b16 %v435, %v434
      %v454 = vpack.c.b16 %v437, %v436
      %v455 = vpack.c.b16 %v439, %v438
      %v488 = vunpack.c.l.b16 %v360
      %v489 = vunpack.c.l.b16 %v361
      %v490 = vunpack.c.l.b16 %v362
      %v491 = vunpack.c.l.b16 %v363
      %v492 = vunpack.c.l.b16 %v364
      %v493 = vunpack.c.l.b16 %v365
      %v494 = vunpack.c.l.b16 %v366
      %v495 = vunpack.c.l.b16 %v367
      %v496 = vunpack.c.l.b16 %v368
      %v497 = vunpack.c.l.b16 %v369
      %v498 = vunpack.c.l.b16 %v370
      %v499 = vunpack.c.l.b16 %v371
      %v500 = vunpack.c.l.b16 %v372
      %v501 = vunpack.c.l.b16 %v373
      %v502 = vunpack.c.l.b16 %v374
      %v503 = vunpack.c.l.b16 %v375
      %v504 = vpack.c.b16 %v489, %v488
      %v505 = vpack.c.b16 %v491, %v490
      %v506 = vpack.c.b16 %v493, %v492
      %v507 = vpack.c.b16 %v495, %v494
      %v508 = vpack.c.b16 %v497, %v496
      %v509 = vpack.c.b16 %v499, %v498
      %v510 = vpack.c.b16 %v501, %v500
      %v511 = vpack.c.b16 %v503, %v502
      %520 = vmatprep.subr.bf16.mxu0 0
      %521 = vmatpush1.bf16.msra.mxu0 %v511
      %522 = vmatprep.subr.bf16.mxu0 0
      %523 = vmatpush1.bf16.msra.mxu0 %v510
      %524 = vmatprep.subr.bf16.mxu0 0
      %525 = vmatpush1.bf16.msra.mxu0 %v509
      %526 = vmatprep.subr.bf16.mxu0 0
      %527 = vmatpush1.bf16.msra.mxu0 %v508
      %528 = vmatprep.subr.bf16.mxu0 0
      %529 = vmatpush1.bf16.msra.mxu0 %v507
      %530 = vmatprep.subr.bf16.mxu0 0
      %531 = vmatpush1.bf16.msra.mxu0 %v506
      %532 = vmatprep.subr.bf16.mxu0 0
      %533 = vmatpush1.bf16.msra.mxu0 %v505
      %534 = vmatprep.subr.bf16.mxu0 0
      %535 = vmatpush1.bf16.msra.mxu0 %v504
      %536 = vmatprep.subr.bf16.mxu0 0
      %537 = vmatpush2.bf16.msra.mxu0 0
      %538 = vmatprep.subr.bf16.mxu0 0
      %539 = vmatpush2.bf16.msra.mxu0 0
      %540 = vmatprep.subr.bf16.mxu0 0
      %541 = vmatpush2.bf16.msra.mxu0 0
      %542 = vmatprep.subr.bf16.mxu0 0
      %543 = vmatpush2.bf16.msra.mxu0 0
      %544 = vmatprep.subr.bf16.mxu0 0
      %545 = vmatpush2.bf16.msra.mxu0 0
      %546 = vmatprep.subr.bf16.mxu0 0
      %547 = vmatpush2.bf16.msra.mxu0 0
      %548 = vmatprep.subr.bf16.mxu0 0
      %549 = vmatpush2.bf16.msra.mxu0 0
      %550 = vmatprep.subr.bf16.mxu0 0
      %551 = vmatpush2.bf16.msra.mxu0 0
      %552 = vmatprep.mubr.bf16.mxu0 0
      %553 = vmatmul.mubr.bf16.gmra.mxu0 %v440
      %v554 = vpop.f32.mrf.mxu0
      %v555 = vadd.f32 0.0, %v554
      %v556 = vpop.f32.mrf.mxu0
      %v557 = vpop.f32.mrf.mxu0
      %v558 = vadd.f32 0.0, %v557
      %v559 = vpop.f32.mrf.mxu0
      %560 = vmatprep.mubr.bf16.mxu0 0
      %561 = vmatmul.mubr.bf16.gmra.mxu0 %v441
      %v562 = vpop.f32.mrf.mxu0
      %v563 = vadd.f32 0.0, %v562
      %v564 = vpop.f32.mrf.mxu0
      %v565 = vpop.f32.mrf.mxu0
      %v566 = vadd.f32 0.0, %v565
      %v567 = vpop.f32.mrf.mxu0
      %568 = vmatprep.mubr.bf16.mxu0 0
      %569 = vmatmul.mubr.bf16.gmra.mxu0 %v442
      %v570 = vpop.f32.mrf.mxu0
      %v571 = vadd.f32 0.0, %v570
      %v572 = vpop.f32.mrf.mxu0
      %v573 = vpop.f32.mrf.mxu0
      %v574 = vadd.f32 0.0, %v573
      %v575 = vpop.f32.mrf.mxu0
      %576 = vmatprep.mubr.bf16.mxu0 0
      %577 = vmatmul.mubr.bf16.gmra.mxu0 %v443
      %v578 = vpop.f32.mrf.mxu0
      %v579 = vadd.f32 0.0, %v578
      %v580 = vpop.f32.mrf.mxu0
      %v581 = vpop.f32.mrf.mxu0
      %v582 = vadd.f32 0.0, %v581
      %v583 = vpop.f32.mrf.mxu0
      %584 = vmatprep.mubr.bf16.mxu0 0
      %585 = vmatmul.mubr.bf16.gmra.mxu0 %v444
      %v586 = vpop.f32.mrf.mxu0
      %v587 = vadd.f32 0.0, %v586
      %v588 = vpop.f32.mrf.mxu0
      %v589 = vpop.f32.mrf.mxu0
      %v590 = vadd.f32 0.0, %v589
      %v591 = vpop.f32.mrf.mxu0
      %592 = vmatprep.mubr.bf16.mxu0 0
      %593 = vmatmul.mubr.bf16.gmra.mxu0 %v445
      %v594 = vpop.f32.mrf.mxu0
      %v595 = vadd.f32 0.0, %v594
      %v596 = vpop.f32.mrf.mxu0
      %v597 = vpop.f32.mrf.mxu0
      %v598 = vadd.f32 0.0, %v597
      %v599 = vpop.f32.mrf.mxu0
      %600 = vmatprep.mubr.bf16.mxu0 0
      %601 = vmatmul.mubr.bf16.gmra.mxu0 %v446
      %v602 = vpop.f32.mrf.mxu0
      %v603 = vadd.f32 0.0, %v602
      %v604 = vpop.f32.mrf.mxu0
      %v605 = vpop.f32.mrf.mxu0
      %v606 = vadd.f32 0.0, %v605
      %v607 = vpop.f32.mrf.mxu0
      %608 = vmatprep.mubr.bf16.mxu0 0
      %609 = vmatmul.mubr.bf16.gmra.mxu0 %v447
      %v610 = vpop.f32.mrf.mxu0
      %v611 = vadd.f32 0.0, %v610
      %v612 = vpop.f32.mrf.mxu0
      %v613 = vpop.f32.mrf.mxu0
      %v614 = vadd.f32 0.0, %v613
      %v615 = vpop.f32.mrf.mxu0
      %616 = vmatprep.mubr.bf16.mxu0 0
      %617 = vmatmul.mubr.bf16.gmra.mxu0 %v448
      %v618 = vpop.f32.mrf.mxu0
      %v619 = vadd.f32 0.0, %v618
      %v620 = vpop.f32.mrf.mxu0
      %v621 = vpop.f32.mrf.mxu0
      %v622 = vadd.f32 0.0, %v621
      %v623 = vpop.f32.mrf.mxu0
      %624 = vmatprep.mubr.bf16.mxu0 0
      %625 = vmatmul.mubr.bf16.gmra.mxu0 %v449
      %v626 = vpop.f32.mrf.mxu0
      %v627 = vadd.f32 0.0, %v626
      %v628 = vpop.f32.mrf.mxu0
      %v629 = vpop.f32.mrf.mxu0
      %v630 = vadd.f32 0.0, %v629
      %v631 = vpop.f32.mrf.mxu0
      %632 = vmatprep.mubr.bf16.mxu0 0
      %633 = vmatmul.mubr.bf16.gmra.mxu0 %v450
      %v634 = vpop.f32.mrf.mxu0
      %v635 = vadd.f32 0.0, %v634
      %v636 = vpop.f32.mrf.mxu0
      %v637 = vpop.f32.mrf.mxu0
      %v638 = vadd.f32 0.0, %v637
      %v639 = vpop.f32.mrf.mxu0
      %640 = vmatprep.mubr.bf16.mxu0 0
      %641 = vmatmul.mubr.bf16.gmra.mxu0 %v451
      %v642 = vpop.f32.mrf.mxu0
      %v643 = vadd.f32 0.0, %v642
      %v644 = vpop.f32.mrf.mxu0
      %v645 = vpop.f32.mrf.mxu0
      %v646 = vadd.f32 0.0, %v645
      %v647 = vpop.f32.mrf.mxu0
      %648 = vmatprep.mubr.bf16.mxu0 0
      %649 = vmatmul.mubr.bf16.gmra.mxu0 %v452
      %v650 = vpop.f32.mrf.mxu0
      %v651 = vadd.f32 0.0, %v650
      %v652 = vpop.f32.mrf.mxu0
      %v653 = vpop.f32.mrf.mxu0
      %v654 = vadd.f32 0.0, %v653
      %v655 = vpop.f32.mrf.mxu0
      %656 = vmatprep.mubr.bf16.mxu0 0
      %657 = vmatmul.mubr.bf16.gmra.mxu0 %v453
      %v658 = vpop.f32.mrf.mxu0
      %v659 = vadd.f32 0.0, %v658
      %v660 = vpop.f32.mrf.mxu0
      %v661 = vpop.f32.mrf.mxu0
      %v662 = vadd.f32 0.0, %v661
      %v663 = vpop.f32.mrf.mxu0
      %664 = vmatprep.mubr.bf16.mxu0 0
      %665 = vmatmul.mubr.bf16.gmra.mxu0 %v454
      %v666 = vpop.f32.mrf.mxu0
      %v667 = vadd.f32 0.0, %v666
      %v668 = vpop.f32.mrf.mxu0
      %v669 = vpop.f32.mrf.mxu0
      %v670 = vadd.f32 0.0, %v669
      %v671 = vpop.f32.mrf.mxu0
      %672 = vmatprep.mubr.bf16.mxu0 0
      %673 = vmatmul.mubr.bf16.gmra.mxu0 %v455
      %v674 = vpop.f32.mrf.mxu0
      %v675 = vadd.f32 0.0, %v674
      %v676 = vpop.f32.mrf.mxu0
      %v677 = vpop.f32.mrf.mxu0
      %v678 = vadd.f32 0.0, %v677
      %v679 = vpop.f32.mrf.mxu0
      %680 = vdwg.mxu0
      %v681 = vadd.f32 %v296, %v555
      %v682 = vadd.f32 %v297, %v558
      %v683 = vadd.f32 %v298, %v563
      %v684 = vadd.f32 %v299, %v566
      %v685 = vadd.f32 %v300, %v571
      %v686 = vadd.f32 %v301, %v574
      %v687 = vadd.f32 %v302, %v579
      %v688 = vadd.f32 %v303, %v582
      %v689 = vadd.f32 %v304, %v587
      %v690 = vadd.f32 %v305, %v590
      %v691 = vadd.f32 %v306, %v595
      %v692 = vadd.f32 %v307, %v598
      %v693 = vadd.f32 %v308, %v603
      %v694 = vadd.f32 %v309, %v606
      %v695 = vadd.f32 %v310, %v611
      %v696 = vadd.f32 %v311, %v614
      %v697 = vadd.f32 %v312, %v619
      %v698 = vadd.f32 %v313, %v622
      %v699 = vadd.f32 %v314, %v627
      %v700 = vadd.f32 %v315, %v630
      %v701 = vadd.f32 %v316, %v635
      %v702 = vadd.f32 %v317, %v638
      %v703 = vadd.f32 %v318, %v643
      %v704 = vadd.f32 %v319, %v646
      %v705 = vadd.f32 %v320, %v651
      %v706 = vadd.f32 %v321, %v654
      %v707 = vadd.f32 %v322, %v659
      %v708 = vadd.f32 %v323, %v662
      %v709 = vadd.f32 %v324, %v667
      %v710 = vadd.f32 %v325, %v670
      %v711 = vadd.f32 %v326, %v675
      %v712 = vadd.f32 %v327, %v678
      %713 = vst [vmem:[#allocation2] sm:$0xff] %v681
      %714 = vst [vmem:[#allocation2 + $0x8] sm:$0xff] %v682
      %715 = vst [vmem:[#allocation2 + $0x10] sm:$0xff] %v683
      %716 = vst [vmem:[#allocation2 + $0x18] sm:$0xff] %v684
      %717 = vst [vmem:[#allocation2 + $0x20] sm:$0xff] %v685
      %718 = vst [vmem:[#allocation2 + $0x28] sm:$0xff] %v686
      %719 = vst [vmem:[#allocation2 + $0x30] sm:$0xff] %v687
      %720 = vst [vmem:[#allocation2 + $0x38] sm:$0xff] %v688
      %721 = vst [vmem:[#allocation2 + $0x40] sm:$0xff] %v689
      %722 = vst [vmem:[#allocation2 + $0x48] sm:$0xff] %v690
      %723 = vst [vmem:[#allocation2 + $0x50] sm:$0xff] %v691
      %724 = vst [vmem:[#allocation2 + $0x58] sm:$0xff] %v692
      %725 = vst [vmem:[#allocation2 + $0x60] sm:$0xff] %v693
      %726 = vst [vmem:[#allocation2 + $0x68] sm:$0xff] %v694
      %727 = vst [vmem:[#allocation2 + $0x70] sm:$0xff] %v695
      %728 = vst [vmem:[#allocation2 + $0x78] sm:$0xff] %v696
      %729 = vst [vmem:[#allocation2 + $0x80] sm:$0xff] %v697
      %730 = vst [vmem:[#allocation2 + $0x88] sm:$0xff] %v698
      %731 = vst [vmem:[#allocation2 + $0x90] sm:$0xff] %v699
      %732 = vst [vmem:[#allocation2 + $0x98] sm:$0xff] %v700
      %733 = vst [vmem:[#allocation2 + $0xa0] sm:$0xff] %v701
      %734 = vst [vmem:[#allocation2 + $0xa8] sm:$0xff] %v702
      %735 = vst [vmem:[#allocation2 + $0xb0] sm:$0xff] %v703
      %736 = vst [vmem:[#allocation2 + $0xb8] sm:$0xff] %v704
      %737 = vst [vmem:[#allocation2 + $0xc0] sm:$0xff] %v705
      %738 = vst [vmem:[#allocation2 + $0xc8] sm:$0xff] %v706
      %739 = vst [vmem:[#allocation2 + $0xd0] sm:$0xff] %v707
      %740 = vst [vmem:[#allocation2 + $0xd8] sm:$0xff] %v708
      %741 = vst [vmem:[#allocation2 + $0xe0] sm:$0xff] %v709
      %742 = vst [vmem:[#allocation2 + $0xe8] sm:$0xff] %v710
      %743 = vst [vmem:[#allocation2 + $0xf0] sm:$0xff] %v711
      %744 = vst [vmem:[#allocation2 + $0xf8] sm:$0xff] %v712
      // Predicated region
      $region37: #{bottleneck_forward.6} parent=31 // pred_check
        %p745 = pneg %p260
      $region38: #{bottleneck_forward.6} parent=31 // pred_check_branch
        %747 = sbr.rel (%p745) target = $region40
      $region39: #{bottleneck_forward.6} parent=31 // pred_region
        %v748 = vld [vmem:[#allocation2] sm:$0xff]
        %v749 = vld [vmem:[#allocation2 + $0x8] sm:$0xff]
        %v750 = vld [vmem:[#allocation2 + $0x10] sm:$0xff]
        %v751 = vld [vmem:[#allocation2 + $0x18] sm:$0xff]
        %v752 = vld [vmem:[#allocation2 + $0x20] sm:$0xff]
        %v753 = vld [vmem:[#allocation2 + $0x28] sm:$0xff]
        %v754 = vld [vmem:[#allocation2 + $0x30] sm:$0xff]
        %v755 = vld [vmem:[#allocation2 + $0x38] sm:$0xff]
        %v756 = vld [vmem:[#allocation2 + $0x40] sm:$0xff]
        %v757 = vld [vmem:[#allocation2 + $0x48] sm:$0xff]
        %v758 = vld [vmem:[#allocation2 + $0x50] sm:$0xff]
        %v759 = vld [vmem:[#allocation2 + $0x58] sm:$0xff]
        %v760 = vld [vmem:[#allocation2 + $0x60] sm:$0xff]
        %v761 = vld [vmem:[#allocation2 + $0x68] sm:$0xff]
        %v762 = vld [vmem:[#allocation2 + $0x70] sm:$0xff]
        %v763 = vld [vmem:[#allocation2 + $0x78] sm:$0xff]
        %v764 = vld [vmem:[#allocation2 + $0x80] sm:$0xff]
        %v765 = vld [vmem:[#allocation2 + $0x88] sm:$0xff]
        %v766 = vld [vmem:[#allocation2 + $0x90] sm:$0xff]
        %v767 = vld [vmem:[#allocation2 + $0x98] sm:$0xff]
        %v768 = vld [vmem:[#allocation2 + $0xa0] sm:$0xff]
        %v769 = vld [vmem:[#allocation2 + $0xa8] sm:$0xff]
        %v770 = vld [vmem:[#allocation2 + $0xb0] sm:$0xff]
        %v771 = vld [vmem:[#allocation2 + $0xb8] sm:$0xff]
        %v772 = vld [vmem:[#allocation2 + $0xc0] sm:$0xff]
        %v773 = vld [vmem:[#allocation2 + $0xc8] sm:$0xff]
        %v774 = vld [vmem:[#allocation2 + $0xd0] sm:$0xff]
        %v775 = vld [vmem:[#allocation2 + $0xd8] sm:$0xff]
        %v776 = vld [vmem:[#allocation2 + $0xe0] sm:$0xff]
        %v777 = vld [vmem:[#allocation2 + $0xe8] sm:$0xff]
        %v778 = vld [vmem:[#allocation2 + $0xf0] sm:$0xff]
        %v779 = vld [vmem:[#allocation2 + $0xf8] sm:$0xff]
        %v780 = vld [vmem:[%s249] sm:$0x1]
        %v782 = vlaneseq
        %v783 = vshrl.u32 %v782, 7
        %v784 = vsub.s32 0, %v783
        %v785 = vrot.slane %v780, %v784
        %v787 = vadd.f32 %v748, %v785
        %v788 = vadd.f32 %v749, %v785
        %v789 = vadd.f32 %v750, %v785
        %v790 = vadd.f32 %v751, %v785
        %v791 = vadd.f32 %v752, %v785
        %v792 = vadd.f32 %v753, %v785
        %v793 = vadd.f32 %v754, %v785
        %v794 = vadd.f32 %v755, %v785
        %v795 = vadd.f32 %v756, %v785
        %v796 = vadd.f32 %v757, %v785
        %v797 = vadd.f32 %v758, %v785
        %v798 = vadd.f32 %v759, %v785
        %v799 = vadd.f32 %v760, %v785
        %v800 = vadd.f32 %v761, %v785
        %v801 = vadd.f32 %v762, %v785
        %v802 = vadd.f32 %v763, %v785
        %v803 = vadd.f32 %v764, %v785
        %v804 = vadd.f32 %v765, %v785
        %v805 = vadd.f32 %v766, %v785
        %v806 = vadd.f32 %v767, %v785
        %v807 = vadd.f32 %v768, %v785
        %v808 = vadd.f32 %v769, %v785
        %v809 = vadd.f32 %v770, %v785
        %v810 = vadd.f32 %v771, %v785
        %v811 = vadd.f32 %v772, %v785
        %v812 = vadd.f32 %v773, %v785
        %v813 = vadd.f32 %v774, %v785
        %v814 = vadd.f32 %v775, %v785
        %v815 = vadd.f32 %v776, %v785
        %v816 = vadd.f32 %v777, %v785
        %v817 = vadd.f32 %v778, %v785
        %v818 = vadd.f32 %v779, %v785
        %v819 = vmax.f32 %v787, 0.0
        %v820 = vmax.f32 %v788, 0.0
        %v821 = vmax.f32 %v789, 0.0
        %v822 = vmax.f32 %v790, 0.0
        %v823 = vmax.f32 %v791, 0.0
        %v824 = vmax.f32 %v792, 0.0
        %v825 = vmax.f32 %v793, 0.0
        %v826 = vmax.f32 %v794, 0.0
        %v827 = vmax.f32 %v795, 0.0
        %v828 = vmax.f32 %v796, 0.0
        %v829 = vmax.f32 %v797, 0.0
        %v830 = vmax.f32 %v798, 0.0
        %v831 = vmax.f32 %v799, 0.0
        %v832 = vmax.f32 %v800, 0.0
        %v833 = vmax.f32 %v801, 0.0
        %v834 = vmax.f32 %v802, 0.0
        %v835 = vmax.f32 %v803, 0.0
        %v836 = vmax.f32 %v804, 0.0
        %v837 = vmax.f32 %v805, 0.0
        %v838 = vmax.f32 %v806, 0.0
        %v839 = vmax.f32 %v807, 0.0
        %v840 = vmax.f32 %v808, 0.0
        %v841 = vmax.f32 %v809, 0.0
        %v842 = vmax.f32 %v810, 0.0
        %v843 = vmax.f32 %v811, 0.0
        %v844 = vmax.f32 %v812, 0.0
        %v845 = vmax.f32 %v813, 0.0
        %v846 = vmax.f32 %v814, 0.0
        %v847 = vmax.f32 %v815, 0.0
        %v848 = vmax.f32 %v816, 0.0
        %v849 = vmax.f32 %v817, 0.0
        %v850 = vmax.f32 %v818, 0.0
        %v851 = vpack.c.bf16 %v820, %v819
        %v852 = vpack.c.bf16 %v822, %v821
        %v853 = vpack.c.bf16 %v824, %v823
        %v854 = vpack.c.bf16 %v826, %v825
        %v855 = vpack.c.bf16 %v828, %v827
        %v856 = vpack.c.bf16 %v830, %v829
        %v857 = vpack.c.bf16 %v832, %v831
        %v858 = vpack.c.bf16 %v834, %v833
        %v859 = vpack.c.bf16 %v836, %v835
        %v860 = vpack.c.bf16 %v838, %v837
        %v861 = vpack.c.bf16 %v840, %v839
        %v862 = vpack.c.bf16 %v842, %v841
        %v863 = vpack.c.bf16 %v844, %v843
        %v864 = vpack.c.bf16 %v846, %v845
        %v865 = vpack.c.bf16 %v848, %v847
        %v866 = vpack.c.bf16 %v850, %v849
        %v883 = vunpack.c.l.b16 %v851
        %v884 = vunpack.c.h.b16 %v851
        %v885 = vunpack.c.l.b16 %v852
        %v886 = vunpack.c.h.b16 %v852
        %v887 = vunpack.c.l.b16 %v853
        %v888 = vunpack.c.h.b16 %v853
        %v889 = vunpack.c.l.b16 %v854
        %v890 = vunpack.c.h.b16 %v854
        %v891 = vunpack.c.l.b16 %v855
        %v892 = vunpack.c.h.b16 %v855
        %v893 = vunpack.c.l.b16 %v856
        %v894 = vunpack.c.h.b16 %v856
        %v895 = vunpack.c.l.b16 %v857
        %v896 = vunpack.c.h.b16 %v857
        %v897 = vunpack.c.l.b16 %v858
        %v898 = vunpack.c.h.b16 %v858
        %v899 = vunpack.c.l.b16 %v859
        %v900 = vunpack.c.h.b16 %v859
        %v901 = vunpack.c.l.b16 %v860
        %v902 = vunpack.c.h.b16 %v860
        %v903 = vunpack.c.l.b16 %v861
        %v904 = vunpack.c.h.b16 %v861
        %v905 = vunpack.c.l.b16 %v862
        %v906 = vunpack.c.h.b16 %v862
        %v907 = vunpack.c.l.b16 %v863
        %v908 = vunpack.c.h.b16 %v863
        %v909 = vunpack.c.l.b16 %v864
        %v910 = vunpack.c.h.b16 %v864
        %v911 = vunpack.c.l.b16 %v865
        %v912 = vunpack.c.h.b16 %v865
        %v913 = vunpack.c.l.b16 %v866
        %v914 = vunpack.c.h.b16 %v866
        %v915 = vpack.c.b16 %v883, %v883
        %v916 = vpack.c.b16 %v884, %v884
        %v917 = vpack.c.b16 %v885, %v885
        %v918 = vpack.c.b16 %v886, %v886
        %v919 = vpack.c.b16 %v887, %v887
        %v920 = vpack.c.b16 %v888, %v888
        %v921 = vpack.c.b16 %v889, %v889
        %v922 = vpack.c.b16 %v890, %v890
        %v923 = vpack.c.b16 %v891, %v891
        %v924 = vpack.c.b16 %v892, %v892
        %v925 = vpack.c.b16 %v893, %v893
        %v926 = vpack.c.b16 %v894, %v894
        %v927 = vpack.c.b16 %v895, %v895
        %v928 = vpack.c.b16 %v896, %v896
        %v929 = vpack.c.b16 %v897, %v897
        %v930 = vpack.c.b16 %v898, %v898
        %v931 = vpack.c.b16 %v899, %v899
        %v932 = vpack.c.b16 %v900, %v900
        %v933 = vpack.c.b16 %v901, %v901
        %v934 = vpack.c.b16 %v902, %v902
        %v935 = vpack.c.b16 %v903, %v903
        %v936 = vpack.c.b16 %v904, %v904
        %v937 = vpack.c.b16 %v905, %v905
        %v938 = vpack.c.b16 %v906, %v906
        %v939 = vpack.c.b16 %v907, %v907
        %v940 = vpack.c.b16 %v908, %v908
        %v941 = vpack.c.b16 %v909, %v909
        %v942 = vpack.c.b16 %v910, %v910
        %v943 = vpack.c.b16 %v911, %v911
        %v944 = vpack.c.b16 %v912, %v912
        %v945 = vpack.c.b16 %v913, %v913
        %v946 = vpack.c.b16 %v914, %v914
        %979 = vst [vmem:[%s257] sm:$0xf] %v915
        %980 = vst [vmem:[%s257 + $0x4] sm:$0xf] %v916
        %981 = vst [vmem:[%s257 + $0x8] sm:$0xf] %v917
        %982 = vst [vmem:[%s257 + $0xc] sm:$0xf] %v918
        %983 = vst [vmem:[%s257 + $0x10] sm:$0xf] %v919
        %984 = vst [vmem:[%s257 + $0x14] sm:$0xf] %v920
        %985 = vst [vmem:[%s257 + $0x18] sm:$0xf] %v921
        %986 = vst [vmem:[%s257 + $0x1c] sm:$0xf] %v922
        %987 = vst [vmem:[%s257 + $0x20] sm:$0xf] %v923
        %988 = vst [vmem:[%s257 + $0x24] sm:$0xf] %v924
        %989 = vst [vmem:[%s257 + $0x28] sm:$0xf] %v925
        %990 = vst [vmem:[%s257 + $0x2c] sm:$0xf] %v926
        %991 = vst [vmem:[%s257 + $0x30] sm:$0xf] %v927
        %992 = vst [vmem:[%s257 + $0x34] sm:$0xf] %v928
        %993 = vst [vmem:[%s257 + $0x38] sm:$0xf] %v929
        %994 = vst [vmem:[%s257 + $0x3c] sm:$0xf] %v930
        %995 = vst [vmem:[%s257 + $0x40] sm:$0xf] %v931
        %996 = vst [vmem:[%s257 + $0x44] sm:$0xf] %v932
        %997 = vst [vmem:[%s257 + $0x48] sm:$0xf] %v933
        %998 = vst [vmem:[%s257 + $0x4c] sm:$0xf] %v934
        %999 = vst [vmem:[%s257 + $0x50] sm:$0xf] %v935
        %1000 = vst [vmem:[%s257 + $0x54] sm:$0xf] %v936
        %1001 = vst [vmem:[%s257 + $0x58] sm:$0xf] %v937
        %1002 = vst [vmem:[%s257 + $0x5c] sm:$0xf] %v938
        %1003 = vst [vmem:[%s257 + $0x60] sm:$0xf] %v939
        %1004 = vst [vmem:[%s257 + $0x64] sm:$0xf] %v940
        %1005 = vst [vmem:[%s257 + $0x68] sm:$0xf] %v941
        %1006 = vst [vmem:[%s257 + $0x6c] sm:$0xf] %v942
        %1007 = vst [vmem:[%s257 + $0x70] sm:$0xf] %v943
        %1008 = vst [vmem:[%s257 + $0x74] sm:$0xf] %v944
        %1009 = vst [vmem:[%s257 + $0x78] sm:$0xf] %v945
        %1010 = vst [vmem:[%s257 + $0x7c] sm:$0xf] %v946
      $region40: #{bottleneck_forward.6} parent=31 // pred_fallthru
        _
      %s1011 = smul.u32 32, %s19
      %p1012 = scmp.lt.s32.totalorder %s1011, 63
      %s1013 = scalar_select %p1012, %s1011, 63
      %p1014 = scmp.lt.s32.totalorder %s20, 0
      %s1015 = scalar_select %p1014, %s20, 0
      %s1016 = sadd.s32 %s1015, %s1013
      %s1017 = smul.addr %s1016, 4
      %s1018 = scalar_lea.vmem %s3, %s1017
      // Predicated region
      $region41: #{bottleneck_forward.6} parent=31 // pred_check
        %p1019 = pneg %p135
      $region42: #{bottleneck_forward.6} parent=31 // pred_check_branch
        %1021 = sbr.rel (%p1019) target = $region44
      $region43: #{bottleneck_forward.6} parent=31 // pred_region
        %s1022 = smul.u32 32, %s19
      $region44: #{bottleneck_forward.6} parent=31 // pred_fallthru
        _
    $region32: #{bottleneck_forward.6} parent=5 // pred_fallthru
      _
    %p1023 = scmp.le.s32.totalorder 2, %s9
    // Predicated region
    $region45: #{bottleneck_forward.6} parent=5 // pred_check
      %p1024 = pneg %p1023
    $region46: #{bottleneck_forward.6} parent=5 // pred_check_branch
      %1026 = sbr.rel (%p1024) target = $region48
    $region47: #{bottleneck_forward.6} parent=5 // pred_region
      %s1027 = ssub.s32 %s9, 2
      // Predicated region
      $region49: #{bottleneck_forward.6} parent=47 // pred_check
        %p1028 = pneg %p141
      $region50: #{bottleneck_forward.6} parent=47 // pred_check_branch
        %1030 = sbr.rel (%p1028) target = $region52
      $region51: #{bottleneck_forward.6} parent=47 // pred_region
        %s1031 = smul.u32 32, %s22
        %p1032 = scmp.lt.s32.totalorder %s1031, 63
        %s1033 = scalar_select %p1032, %s1031, 63
        %p1034 = scmp.lt.s32.totalorder %s23, 0
        %s1035 = scalar_select %p1034, %s23, 0
        %s1036 = sadd.s32 %s1035, %s1033
        %s1037 = smul.addr %s1036, 4
        %s1038 = scalar_lea.vmem %s3, %s1037
      $region52: #{bottleneck_forward.6} parent=47 // pred_fallthru
        _
    $region48: #{bottleneck_forward.6} parent=5 // pred_fallthru
      _
  $region6: #{bottleneck_forward.6} parent=0 // loop_footer
    %s13 = sadd.s32 1, %s9
  $region7: #{bottleneck_forward.6} parent=0 // loop_footer_branch
    %8 = sbr.rel target = $region3
  $region8: #{bottleneck_forward.6} parent=0 // loop_exit
    _

// kernel: bottleneck_forward.7
$region0: #{bottleneck_forward.7}
  #allocation0 [shape = 'u32[]', space=smem, size = 0x4, offset = 0x4, fixed_abs, tag = 'smem constant byte address 0x4 - core index']
  #allocation1 [shape = 'u32[144,128]{1,0:T(1,128)}', space=vmem, size = 0x12000, scoped, tag = 'internal scratch']
  #allocation2 [shape = 'f32[128,128]{1,0:T(8,128)}', space=vmem, size = 0x10000, scoped, tag = 'scratch operand']
  %s0 = inlined_call_operand.vmem [shape: bf16[128,128], index: 0, kind: input, shape index: {}]
  %s1 = inlined_call_operand.vmem [shape: bf16[128,128], index: 1, kind: input, shape index: {}]
  %s2 = inlined_call_operand.vmem [shape: f32[1,128], index: 2, kind: input, shape index: {}]
  %s3 = inlined_call_operand.vmem [shape: bf16[128,128], index: 3, kind: output, shape index: {}]
  %s4 = sld [smem:[#allocation0]]
  $region30: #{bottleneck_forward.7} parent=0
    _
  %s6 = ssub.s32 1, %s4
  %s7 = scalar_select 0, %s6, %s4
  // Predicated region
  $region2: #{bottleneck_forward.7} parent=0 // pred_check
    _
  $region3: #{bottleneck_forward.7} parent=0 // pred_check_branch
    %9 = sbr.rel (0) target = $region5
  $region4: #{bottleneck_forward.7} parent=0 // pred_region
    _
  $region5: #{bottleneck_forward.7} parent=0 // pred_fallthru
    _
  // Predicated region
  $region6: #{bottleneck_forward.7} parent=0 // pred_check
    _
  $region7: #{bottleneck_forward.7} parent=0 // pred_check_branch
    %11 = sbr.rel (0) target = $region9
  $region8: #{bottleneck_forward.7} parent=0 // pred_region
    _
  $region9: #{bottleneck_forward.7} parent=0 // pred_fallthru
    _
  // Predicated region
  $region10: #{bottleneck_forward.7} parent=0 // pred_check
    _
  $region11: #{bottleneck_forward.7} parent=0 // pred_check_branch
    %13 = sbr.rel (0) target = $region13
  $region12: #{bottleneck_forward.7} parent=0 // pred_region
    _
  $region13: #{bottleneck_forward.7} parent=0 // pred_fallthru
    _
  %p15 = scmp.eq.s32.totalorder 0, 0
  // Predicated region
  $region14: #{bottleneck_forward.7} parent=0 // pred_check
    %p16 = pneg %p15
  $region15: #{bottleneck_forward.7} parent=0 // pred_check_branch
    %18 = sbr.rel (%p16) target = $region17
  $region16: #{bottleneck_forward.7} parent=0 // pred_region
    %19 = vst [vmem:[#allocation2] sm:$0xff] 0.0
    %20 = vst [vmem:[#allocation2 + $0x8] sm:$0xff] 0.0
    %21 = vst [vmem:[#allocation2 + $0x10] sm:$0xff] 0.0
    %22 = vst [vmem:[#allocation2 + $0x18] sm:$0xff] 0.0
    %23 = vst [vmem:[#allocation2 + $0x20] sm:$0xff] 0.0
    %24 = vst [vmem:[#allocation2 + $0x28] sm:$0xff] 0.0
    %25 = vst [vmem:[#allocation2 + $0x30] sm:$0xff] 0.0
    %26 = vst [vmem:[#allocation2 + $0x38] sm:$0xff] 0.0
    %27 = vst [vmem:[#allocation2 + $0x40] sm:$0xff] 0.0
    %28 = vst [vmem:[#allocation2 + $0x48] sm:$0xff] 0.0
    %29 = vst [vmem:[#allocation2 + $0x50] sm:$0xff] 0.0
    %30 = vst [vmem:[#allocation2 + $0x58] sm:$0xff] 0.0
    %31 = vst [vmem:[#allocation2 + $0x60] sm:$0xff] 0.0
    %32 = vst [vmem:[#allocation2 + $0x68] sm:$0xff] 0.0
    %33 = vst [vmem:[#allocation2 + $0x70] sm:$0xff] 0.0
    %34 = vst [vmem:[#allocation2 + $0x78] sm:$0xff] 0.0
  $region17: #{bottleneck_forward.7} parent=0 // pred_fallthru
    _
  %v35 = vld [vmem:[#allocation2] sm:$0xff]
  %v36 = vld [vmem:[#allocation2 + $0x8] sm:$0xff]
  %v37 = vld [vmem:[#allocation2 + $0x10] sm:$0xff]
  %v38 = vld [vmem:[#allocation2 + $0x18] sm:$0xff]
  %v39 = vld [vmem:[#allocation2 + $0x20] sm:$0xff]
  %v40 = vld [vmem:[#allocation2 + $0x28] sm:$0xff]
  %v41 = vld [vmem:[#allocation2 + $0x30] sm:$0xff]
  %v42 = vld [vmem:[#allocation2 + $0x38] sm:$0xff]
  %v43 = vld [vmem:[#allocation2 + $0x40] sm:$0xff]
  %v44 = vld [vmem:[#allocation2 + $0x48] sm:$0xff]
  %v45 = vld [vmem:[#allocation2 + $0x50] sm:$0xff]
  %v46 = vld [vmem:[#allocation2 + $0x58] sm:$0xff]
  %v47 = vld [vmem:[#allocation2 + $0x60] sm:$0xff]
  %v48 = vld [vmem:[#allocation2 + $0x68] sm:$0xff]
  %v49 = vld [vmem:[#allocation2 + $0x70] sm:$0xff]
  %v50 = vld [vmem:[#allocation2 + $0x78] sm:$0xff]
  %v51 = vld [vmem:[%s0] sm:$0xf]
  %v52 = vld [vmem:[%s0 + $0x4] sm:$0xf]
  %v53 = vld [vmem:[%s0 + $0x8] sm:$0xf]
  %v54 = vld [vmem:[%s0 + $0xc] sm:$0xf]
  %v55 = vld [vmem:[%s0 + $0x10] sm:$0xf]
  %v56 = vld [vmem:[%s0 + $0x14] sm:$0xf]
  %v57 = vld [vmem:[%s0 + $0x18] sm:$0xf]
  %v58 = vld [vmem:[%s0 + $0x1c] sm:$0xf]
  %v59 = vld [vmem:[%s0 + $0x20] sm:$0xf]
  %v60 = vld [vmem:[%s0 + $0x24] sm:$0xf]
  %v61 = vld [vmem:[%s0 + $0x28] sm:$0xf]
  %v62 = vld [vmem:[%s0 + $0x2c] sm:$0xf]
  %v63 = vld [vmem:[%s0 + $0x30] sm:$0xf]
  %v64 = vld [vmem:[%s0 + $0x34] sm:$0xf]
  %v65 = vld [vmem:[%s0 + $0x38] sm:$0xf]
  %v66 = vld [vmem:[%s0 + $0x3c] sm:$0xf]
  %v67 = vld [vmem:[%s1] sm:$0xf]
  %v68 = vld [vmem:[%s1 + $0x4] sm:$0xf]
  %v69 = vld [vmem:[%s1 + $0x8] sm:$0xf]
  %v70 = vld [vmem:[%s1 + $0xc] sm:$0xf]
  %v71 = vld [vmem:[%s1 + $0x10] sm:$0xf]
  %v72 = vld [vmem:[%s1 + $0x14] sm:$0xf]
  %v73 = vld [vmem:[%s1 + $0x18] sm:$0xf]
  %v74 = vld [vmem:[%s1 + $0x1c] sm:$0xf]
  %v75 = vld [vmem:[%s1 + $0x20] sm:$0xf]
  %v76 = vld [vmem:[%s1 + $0x24] sm:$0xf]
  %v77 = vld [vmem:[%s1 + $0x28] sm:$0xf]
  %v78 = vld [vmem:[%s1 + $0x2c] sm:$0xf]
  %v79 = vld [vmem:[%s1 + $0x30] sm:$0xf]
  %v80 = vld [vmem:[%s1 + $0x34] sm:$0xf]
  %v81 = vld [vmem:[%s1 + $0x38] sm:$0xf]
  %v82 = vld [vmem:[%s1 + $0x3c] sm:$0xf]
  %v99 = vunpack.c.l.b16 %v51
  %v100 = vunpack.c.l.b16 %v52
  %v101 = vunpack.c.l.b16 %v53
  %v102 = vunpack.c.l.b16 %v54
  %v103 = vunpack.c.l.b16 %v55
  %v104 = vunpack.c.l.b16 %v56
  %v105 = vunpack.c.l.b16 %v57
  %v106 = vunpack.c.l.b16 %v58
  %v107 = vunpack.c.l.b16 %v59
  %v108 = vunpack.c.l.b16 %v60
  %v109 = vunpack.c.l.b16 %v61
  %v110 = vunpack.c.l.b16 %v62
  %v111 = vunpack.c.l.b16 %v63
  %v112 = vunpack.c.l.b16 %v64
  %v113 = vunpack.c.l.b16 %v65
  %v114 = vunpack.c.l.b16 %v66
  %v115 = vpack.c.b16 %v100, %v99
  %v116 = vpack.c.b16 %v102, %v101
  %v117 = vpack.c.b16 %v104, %v103
  %v118 = vpack.c.b16 %v106, %v105
  %v119 = vpack.c.b16 %v108, %v107
  %v120 = vpack.c.b16 %v110, %v109
  %v121 = vpack.c.b16 %v112, %v111
  %v122 = vpack.c.b16 %v114, %v113
  %v147 = vunpack.c.l.b16 %v67
  %v148 = vunpack.c.l.b16 %v68
  %v149 = vunpack.c.l.b16 %v69
  %v150 = vunpack.c.l.b16 %v70
  %v151 = vunpack.c.l.b16 %v71
  %v152 = vunpack.c.l.b16 %v72
  %v153 = vunpack.c.l.b16 %v73
  %v154 = vunpack.c.l.b16 %v74
  %v155 = vunpack.c.l.b16 %v75
  %v156 = vunpack.c.l.b16 %v76
  %v157 = vunpack.c.l.b16 %v77
  %v158 = vunpack.c.l.b16 %v78
  %v159 = vunpack.c.l.b16 %v79
  %v160 = vunpack.c.l.b16 %v80
  %v161 = vunpack.c.l.b16 %v81
  %v162 = vunpack.c.l.b16 %v82
  %v163 = vpack.c.b16 %v148, %v147
  %v164 = vpack.c.b16 %v150, %v149
  %v165 = vpack.c.b16 %v152, %v151
  %v166 = vpack.c.b16 %v154, %v153
  %v167 = vpack.c.b16 %v156, %v155
  %v168 = vpack.c.b16 %v158, %v157
  %v169 = vpack.c.b16 %v160, %v159
  %v170 = vpack.c.b16 %v162, %v161
  %179 = vmatprep.subr.bf16.mxu0 0
  %180 = vmatpush1.bf16.msra.mxu0 %v170
  %181 = vmatprep.subr.bf16.mxu0 0
  %182 = vmatpush1.bf16.msra.mxu0 %v169
  %183 = vmatprep.subr.bf16.mxu0 0
  %184 = vmatpush1.bf16.msra.mxu0 %v168
  %185 = vmatprep.subr.bf16.mxu0 0
  %186 = vmatpush1.bf16.msra.mxu0 %v167
  %187 = vmatprep.subr.bf16.mxu0 0
  %188 = vmatpush1.bf16.msra.mxu0 %v166
  %189 = vmatprep.subr.bf16.mxu0 0
  %190 = vmatpush1.bf16.msra.mxu0 %v165
  %191 = vmatprep.subr.bf16.mxu0 0
  %192 = vmatpush1.bf16.msra.mxu0 %v164
  %193 = vmatprep.subr.bf16.mxu0 0
  %194 = vmatpush1.bf16.msra.mxu0 %v163
  %195 = vmatprep.subr.bf16.mxu0 0
  %196 = vmatpush2.bf16.msra.mxu0 0
  %197 = vmatprep.subr.bf16.mxu0 0
  %198 = vmatpush2.bf16.msra.mxu0 0
  %199 = vmatprep.subr.bf16.mxu0 0
  %200 = vmatpush2.bf16.msra.mxu0 0
  %201 = vmatprep.subr.bf16.mxu0 0
  %202 = vmatpush2.bf16.msra.mxu0 0
  %203 = vmatprep.subr.bf16.mxu0 0
  %204 = vmatpush2.bf16.msra.mxu0 0
  %205 = vmatprep.subr.bf16.mxu0 0
  %206 = vmatpush2.bf16.msra.mxu0 0
  %207 = vmatprep.subr.bf16.mxu0 0
  %208 = vmatpush2.bf16.msra.mxu0 0
  %209 = vmatprep.subr.bf16.mxu0 0
  %210 = vmatpush2.bf16.msra.mxu0 0
  %211 = vmatprep.mubr.bf16.mxu0 0
  %212 = vmatmul.mubr.bf16.gmra.mxu0 %v115
  %v213 = vpop.f32.mrf.mxu0
  %v214 = vadd.f32 0.0, %v213
  %v215 = vpop.f32.mrf.mxu0
  %v216 = vpop.f32.mrf.mxu0
  %v217 = vadd.f32 0.0, %v216
  %v218 = vpop.f32.mrf.mxu0
  %219 = vmatprep.mubr.bf16.mxu0 0
  %220 = vmatmul.mubr.bf16.gmra.mxu0 %v116
  %v221 = vpop.f32.mrf.mxu0
  %v222 = vadd.f32 0.0, %v221
  %v223 = vpop.f32.mrf.mxu0
  %v224 = vpop.f32.mrf.mxu0
  %v225 = vadd.f32 0.0, %v224
  %v226 = vpop.f32.mrf.mxu0
  %227 = vmatprep.mubr.bf16.mxu0 0
  %228 = vmatmul.mubr.bf16.gmra.mxu0 %v117
  %v229 = vpop.f32.mrf.mxu0
  %v230 = vadd.f32 0.0, %v229
  %v231 = vpop.f32.mrf.mxu0
  %v232 = vpop.f32.mrf.mxu0
  %v233 = vadd.f32 0.0, %v232
  %v234 = vpop.f32.mrf.mxu0
  %235 = vmatprep.mubr.bf16.mxu0 0
  %236 = vmatmul.mubr.bf16.gmra.mxu0 %v118
  %v237 = vpop.f32.mrf.mxu0
  %v238 = vadd.f32 0.0, %v237
  %v239 = vpop.f32.mrf.mxu0
  %v240 = vpop.f32.mrf.mxu0
  %v241 = vadd.f32 0.0, %v240
  %v242 = vpop.f32.mrf.mxu0
  %243 = vmatprep.mubr.bf16.mxu0 0
  %244 = vmatmul.mubr.bf16.gmra.mxu0 %v119
  %v245 = vpop.f32.mrf.mxu0
  %v246 = vadd.f32 0.0, %v245
  %v247 = vpop.f32.mrf.mxu0
  %v248 = vpop.f32.mrf.mxu0
  %v249 = vadd.f32 0.0, %v248
  %v250 = vpop.f32.mrf.mxu0
  %251 = vmatprep.mubr.bf16.mxu0 0
  %252 = vmatmul.mubr.bf16.gmra.mxu0 %v120
  %v253 = vpop.f32.mrf.mxu0
  %v254 = vadd.f32 0.0, %v253
  %v255 = vpop.f32.mrf.mxu0
  %v256 = vpop.f32.mrf.mxu0
  %v257 = vadd.f32 0.0, %v256
  %v258 = vpop.f32.mrf.mxu0
  %259 = vmatprep.mubr.bf16.mxu0 0
  %260 = vmatmul.mubr.bf16.gmra.mxu0 %v121
  %v261 = vpop.f32.mrf.mxu0
  %v262 = vadd.f32 0.0, %v261
  %v263 = vpop.f32.mrf.mxu0
  %v264 = vpop.f32.mrf.mxu0
  %v265 = vadd.f32 0.0, %v264
  %v266 = vpop.f32.mrf.mxu0
  %267 = vmatprep.mubr.bf16.mxu0 0
  %268 = vmatmul.mubr.bf16.gmra.mxu0 %v122
  %v269 = vpop.f32.mrf.mxu0
  %v270 = vadd.f32 0.0, %v269
  %v271 = vpop.f32.mrf.mxu0
  %v272 = vpop.f32.mrf.mxu0
  %v273 = vadd.f32 0.0, %v272
  %v274 = vpop.f32.mrf.mxu0
  %275 = vdwg.mxu0
  %v276 = vadd.f32 %v35, %v214
  %v277 = vadd.f32 %v36, %v217
  %v278 = vadd.f32 %v37, %v222
  %v279 = vadd.f32 %v38, %v225
  %v280 = vadd.f32 %v39, %v230
  %v281 = vadd.f32 %v40, %v233
  %v282 = vadd.f32 %v41, %v238
  %v283 = vadd.f32 %v42, %v241
  %v284 = vadd.f32 %v43, %v246
  %v285 = vadd.f32 %v44, %v249
  %v286 = vadd.f32 %v45, %v254
  %v287 = vadd.f32 %v46, %v257
  %v288 = vadd.f32 %v47, %v262
  %v289 = vadd.f32 %v48, %v265
  %v290 = vadd.f32 %v49, %v270
  %v291 = vadd.f32 %v50, %v273
  %292 = vst [vmem:[#allocation2] sm:$0xff] %v276
  %293 = vst [vmem:[#allocation2 + $0x8] sm:$0xff] %v277
  %294 = vst [vmem:[#allocation2 + $0x10] sm:$0xff] %v278
  %295 = vst [vmem:[#allocation2 + $0x18] sm:$0xff] %v279
  %296 = vst [vmem:[#allocation2 + $0x20] sm:$0xff] %v280
  %297 = vst [vmem:[#allocation2 + $0x28] sm:$0xff] %v281
  %298 = vst [vmem:[#allocation2 + $0x30] sm:$0xff] %v282
  %299 = vst [vmem:[#allocation2 + $0x38] sm:$0xff] %v283
  %300 = vst [vmem:[#allocation2 + $0x40] sm:$0xff] %v284
  %301 = vst [vmem:[#allocation2 + $0x48] sm:$0xff] %v285
  %302 = vst [vmem:[#allocation2 + $0x50] sm:$0xff] %v286
  %303 = vst [vmem:[#allocation2 + $0x58] sm:$0xff] %v287
  %304 = vst [vmem:[#allocation2 + $0x60] sm:$0xff] %v288
  %305 = vst [vmem:[#allocation2 + $0x68] sm:$0xff] %v289
  %306 = vst [vmem:[#allocation2 + $0x70] sm:$0xff] %v290
  %307 = vst [vmem:[#allocation2 + $0x78] sm:$0xff] %v291
  // Predicated region
  $region18: #{bottleneck_forward.7} parent=0 // pred_check
    %p308 = pneg %p15
  $region19: #{bottleneck_forward.7} parent=0 // pred_check_branch
    %310 = sbr.rel (%p308) target = $region21
  $region20: #{bottleneck_forward.7} parent=0 // pred_region
    %v311 = vld [vmem:[#allocation2] sm:$0xff]
    %v312 = vld [vmem:[#allocation2 + $0x8] sm:$0xff]
    %v313 = vld [vmem:[#allocation2 + $0x10] sm:$0xff]
    %v314 = vld [vmem:[#allocation2 + $0x18] sm:$0xff]
    %v315 = vld [vmem:[#allocation2 + $0x20] sm:$0xff]
    %v316 = vld [vmem:[#allocation2 + $0x28] sm:$0xff]
    %v317 = vld [vmem:[#allocation2 + $0x30] sm:$0xff]
    %v318 = vld [vmem:[#allocation2 + $0x38] sm:$0xff]
    %v319 = vld [vmem:[#allocation2 + $0x40] sm:$0xff]
    %v320 = vld [vmem:[#allocation2 + $0x48] sm:$0xff]
    %v321 = vld [vmem:[#allocation2 + $0x50] sm:$0xff]
    %v322 = vld [vmem:[#allocation2 + $0x58] sm:$0xff]
    %v323 = vld [vmem:[#allocation2 + $0x60] sm:$0xff]
    %v324 = vld [vmem:[#allocation2 + $0x68] sm:$0xff]
    %v325 = vld [vmem:[#allocation2 + $0x70] sm:$0xff]
    %v326 = vld [vmem:[#allocation2 + $0x78] sm:$0xff]
    %v327 = vld [vmem:[%s2] sm:$0x1]
    %v329 = vlaneseq
    %v330 = vshrl.u32 %v329, 7
    %v331 = vsub.s32 0, %v330
    %v332 = vrot.slane %v327, %v331
    %v334 = vadd.f32 %v311, %v332
    %v335 = vadd.f32 %v312, %v332
    %v336 = vadd.f32 %v313, %v332
    %v337 = vadd.f32 %v314, %v332
    %v338 = vadd.f32 %v315, %v332
    %v339 = vadd.f32 %v316, %v332
    %v340 = vadd.f32 %v317, %v332
    %v341 = vadd.f32 %v318, %v332
    %v342 = vadd.f32 %v319, %v332
    %v343 = vadd.f32 %v320, %v332
    %v344 = vadd.f32 %v321, %v332
    %v345 = vadd.f32 %v322, %v332
    %v346 = vadd.f32 %v323, %v332
    %v347 = vadd.f32 %v324, %v332
    %v348 = vadd.f32 %v325, %v332
    %v349 = vadd.f32 %v326, %v332
    %v350 = vmax.f32 %v334, 0.0
    %v351 = vmax.f32 %v335, 0.0
    %v352 = vmax.f32 %v336, 0.0
    %v353 = vmax.f32 %v337, 0.0
    %v354 = vmax.f32 %v338, 0.0
    %v355 = vmax.f32 %v339, 0.0
    %v356 = vmax.f32 %v340, 0.0
    %v357 = vmax.f32 %v341, 0.0
    %v358 = vmax.f32 %v342, 0.0
    %v359 = vmax.f32 %v343, 0.0
    %v360 = vmax.f32 %v344, 0.0
    %v361 = vmax.f32 %v345, 0.0
    %v362 = vmax.f32 %v346, 0.0
    %v363 = vmax.f32 %v347, 0.0
    %v364 = vmax.f32 %v348, 0.0
    %v365 = vmax.f32 %v349, 0.0
    %v366 = vpack.c.bf16 %v351, %v350
    %v367 = vpack.c.bf16 %v353, %v352
    %v368 = vpack.c.bf16 %v355, %v354
    %v369 = vpack.c.bf16 %v357, %v356
    %v370 = vpack.c.bf16 %v359, %v358
    %v371 = vpack.c.bf16 %v361, %v360
    %v372 = vpack.c.bf16 %v363, %v362
    %v373 = vpack.c.bf16 %v365, %v364
    %v382 = vunpack.c.l.b16 %v366
    %v383 = vunpack.c.h.b16 %v366
    %v384 = vunpack.c.l.b16 %v367
    %v385 = vunpack.c.h.b16 %v367
    %v386 = vunpack.c.l.b16 %v368
    %v387 = vunpack.c.h.b16 %v368
    %v388 = vunpack.c.l.b16 %v369
    %v389 = vunpack.c.h.b16 %v369
    %v390 = vunpack.c.l.b16 %v370
    %v391 = vunpack.c.h.b16 %v370
    %v392 = vunpack.c.l.b16 %v371
    %v393 = vunpack.c.h.b16 %v371
    %v394 = vunpack.c.l.b16 %v372
    %v395 = vunpack.c.h.b16 %v372
    %v396 = vunpack.c.l.b16 %v373
    %v397 = vunpack.c.h.b16 %v373
    %v398 = vpack.c.b16 %v382, %v382
    %v399 = vpack.c.b16 %v383, %v383
    %v400 = vpack.c.b16 %v384, %v384
    %v401 = vpack.c.b16 %v385, %v385
    %v402 = vpack.c.b16 %v386, %v386
    %v403 = vpack.c.b16 %v387, %v387
    %v404 = vpack.c.b16 %v388, %v388
    %v405 = vpack.c.b16 %v389, %v389
    %v406 = vpack.c.b16 %v390, %v390
    %v407 = vpack.c.b16 %v391, %v391
    %v408 = vpack.c.b16 %v392, %v392
    %v409 = vpack.c.b16 %v393, %v393
    %v410 = vpack.c.b16 %v394, %v394
    %v411 = vpack.c.b16 %v395, %v395
    %v412 = vpack.c.b16 %v396, %v396
    %v413 = vpack.c.b16 %v397, %v397
    %430 = vst [vmem:[%s3] sm:$0xf] %v398
    %431 = vst [vmem:[%s3 + $0x4] sm:$0xf] %v399
    %432 = vst [vmem:[%s3 + $0x8] sm:$0xf] %v400
    %433 = vst [vmem:[%s3 + $0xc] sm:$0xf] %v401
    %434 = vst [vmem:[%s3 + $0x10] sm:$0xf] %v402
    %435 = vst [vmem:[%s3 + $0x14] sm:$0xf] %v403
    %436 = vst [vmem:[%s3 + $0x18] sm:$0xf] %v404
    %437 = vst [vmem:[%s3 + $0x1c] sm:$0xf] %v405
    %438 = vst [vmem:[%s3 + $0x20] sm:$0xf] %v406
    %439 = vst [vmem:[%s3 + $0x24] sm:$0xf] %v407
    %440 = vst [vmem:[%s3 + $0x28] sm:$0xf] %v408
    %441 = vst [vmem:[%s3 + $0x2c] sm:$0xf] %v409
    %442 = vst [vmem:[%s3 + $0x30] sm:$0xf] %v410
    %443 = vst [vmem:[%s3 + $0x34] sm:$0xf] %v411
    %444 = vst [vmem:[%s3 + $0x38] sm:$0xf] %v412
    %445 = vst [vmem:[%s3 + $0x3c] sm:$0xf] %v413
  $region21: #{bottleneck_forward.7} parent=0 // pred_fallthru
    _
  // Predicated region
  $region22: #{bottleneck_forward.7} parent=0 // pred_check
    _
  $region23: #{bottleneck_forward.7} parent=0 // pred_check_branch
    %447 = sbr.rel (0) target = $region25
  $region24: #{bottleneck_forward.7} parent=0 // pred_region
    _
  $region25: #{bottleneck_forward.7} parent=0 // pred_fallthru
    _
  // Predicated region
  $region26: #{bottleneck_forward.7} parent=0 // pred_check
    _
  $region27: #{bottleneck_forward.7} parent=0 // pred_check_branch
    %449 = sbr.rel (0) target = $region29
  $region28: #{bottleneck_forward.7} parent=0 // pred_region
    _
  $region29: #{bottleneck_forward.7} parent=0 // pred_fallthru
    _

// kernel: bottleneck_forward.8
$region0: #{bottleneck_forward.8}
  #allocation0 [shape = 'u32[]', space=smem, size = 0x4, offset = 0x4, fixed_abs, tag = 'smem constant byte address 0x4 - core index']
  #allocation1 [shape = 'u32[144,128]{1,0:T(1,128)}', space=vmem, size = 0x12000, scoped, tag = 'internal scratch']
  #allocation2 [shape = 'f32[128,128]{1,0:T(8,128)}', space=vmem, size = 0x10000, scoped, tag = 'scratch operand']
  %s0 = inlined_call_operand.vmem [shape: bf16[128,256], index: 0, kind: input, shape index: {}]
  %s1 = inlined_call_operand.vmem [shape: bf16[256,128], index: 1, kind: input, shape index: {}]
  %s2 = inlined_call_operand.vmem [shape: f32[1,128], index: 2, kind: input, shape index: {}]
  %s3 = inlined_call_operand.vmem [shape: bf16[128,128], index: 3, kind: output, shape index: {}]
  %s4 = sld [smem:[#allocation0]]
  $region30: #{bottleneck_forward.8} parent=0
    _
  %s6 = ssub.s32 1, %s4
  %s7 = scalar_select 0, %s6, %s4
  // Predicated region
  $region2: #{bottleneck_forward.8} parent=0 // pred_check
    _
  $region3: #{bottleneck_forward.8} parent=0 // pred_check_branch
    %9 = sbr.rel (0) target = $region5
  $region4: #{bottleneck_forward.8} parent=0 // pred_region
    _
  $region5: #{bottleneck_forward.8} parent=0 // pred_fallthru
    _
  // Predicated region
  $region6: #{bottleneck_forward.8} parent=0 // pred_check
    _
  $region7: #{bottleneck_forward.8} parent=0 // pred_check_branch
    %11 = sbr.rel (0) target = $region9
  $region8: #{bottleneck_forward.8} parent=0 // pred_region
    _
  $region9: #{bottleneck_forward.8} parent=0 // pred_fallthru
    _
  // Predicated region
  $region10: #{bottleneck_forward.8} parent=0 // pred_check
    _
  $region11: #{bottleneck_forward.8} parent=0 // pred_check_branch
    %13 = sbr.rel (0) target = $region13
  $region12: #{bottleneck_forward.8} parent=0 // pred_region
    _
  $region13: #{bottleneck_forward.8} parent=0 // pred_fallthru
    _
  %p15 = scmp.eq.s32.totalorder 0, 0
  // Predicated region
  $region14: #{bottleneck_forward.8} parent=0 // pred_check
    %p16 = pneg %p15
  $region15: #{bottleneck_forward.8} parent=0 // pred_check_branch
    %18 = sbr.rel (%p16) target = $region17
  $region16: #{bottleneck_forward.8} parent=0 // pred_region
    %19 = vst [vmem:[#allocation2] sm:$0xff] 0.0
    %20 = vst [vmem:[#allocation2 + $0x8] sm:$0xff] 0.0
    %21 = vst [vmem:[#allocation2 + $0x10] sm:$0xff] 0.0
    %22 = vst [vmem:[#allocation2 + $0x18] sm:$0xff] 0.0
    %23 = vst [vmem:[#allocation2 + $0x20] sm:$0xff] 0.0
    %24 = vst [vmem:[#allocation2 + $0x28] sm:$0xff] 0.0
    %25 = vst [vmem:[#allocation2 + $0x30] sm:$0xff] 0.0
    %26 = vst [vmem:[#allocation2 + $0x38] sm:$0xff] 0.0
    %27 = vst [vmem:[#allocation2 + $0x40] sm:$0xff] 0.0
    %28 = vst [vmem:[#allocation2 + $0x48] sm:$0xff] 0.0
    %29 = vst [vmem:[#allocation2 + $0x50] sm:$0xff] 0.0
    %30 = vst [vmem:[#allocation2 + $0x58] sm:$0xff] 0.0
    %31 = vst [vmem:[#allocation2 + $0x60] sm:$0xff] 0.0
    %32 = vst [vmem:[#allocation2 + $0x68] sm:$0xff] 0.0
    %33 = vst [vmem:[#allocation2 + $0x70] sm:$0xff] 0.0
    %34 = vst [vmem:[#allocation2 + $0x78] sm:$0xff] 0.0
  $region17: #{bottleneck_forward.8} parent=0 // pred_fallthru
    _
  %v35 = vld [vmem:[#allocation2] sm:$0xff]
  %v36 = vld [vmem:[#allocation2 + $0x8] sm:$0xff]
  %v37 = vld [vmem:[#allocation2 + $0x10] sm:$0xff]
  %v38 = vld [vmem:[#allocation2 + $0x18] sm:$0xff]
  %v39 = vld [vmem:[#allocation2 + $0x20] sm:$0xff]
  %v40 = vld [vmem:[#allocation2 + $0x28] sm:$0xff]
  %v41 = vld [vmem:[#allocation2 + $0x30] sm:$0xff]
  %v42 = vld [vmem:[#allocation2 + $0x38] sm:$0xff]
  %v43 = vld [vmem:[#allocation2 + $0x40] sm:$0xff]
  %v44 = vld [vmem:[#allocation2 + $0x48] sm:$0xff]
  %v45 = vld [vmem:[#allocation2 + $0x50] sm:$0xff]
  %v46 = vld [vmem:[#allocation2 + $0x58] sm:$0xff]
  %v47 = vld [vmem:[#allocation2 + $0x60] sm:$0xff]
  %v48 = vld [vmem:[#allocation2 + $0x68] sm:$0xff]
  %v49 = vld [vmem:[#allocation2 + $0x70] sm:$0xff]
  %v50 = vld [vmem:[#allocation2 + $0x78] sm:$0xff]
  %v51 = vld [vmem:[%s0] sm:$0xff]
  %v52 = vld [vmem:[%s0 + $0x8] sm:$0xff]
  %v53 = vld [vmem:[%s0 + $0x10] sm:$0xff]
  %v54 = vld [vmem:[%s0 + $0x18] sm:$0xff]
  %v55 = vld [vmem:[%s0 + $0x20] sm:$0xff]
  %v56 = vld [vmem:[%s0 + $0x28] sm:$0xff]
  %v57 = vld [vmem:[%s0 + $0x30] sm:$0xff]
  %v58 = vld [vmem:[%s0 + $0x38] sm:$0xff]
  %v59 = vld [vmem:[%s0 + $0x40] sm:$0xff]
  %v60 = vld [vmem:[%s0 + $0x48] sm:$0xff]
  %v61 = vld [vmem:[%s0 + $0x50] sm:$0xff]
  %v62 = vld [vmem:[%s0 + $0x58] sm:$0xff]
  %v63 = vld [vmem:[%s0 + $0x60] sm:$0xff]
  %v64 = vld [vmem:[%s0 + $0x68] sm:$0xff]
  %v65 = vld [vmem:[%s0 + $0x70] sm:$0xff]
  %v66 = vld [vmem:[%s0 + $0x78] sm:$0xff]
  %v67 = vld [vmem:[%s1] sm:$0xf]
  %v68 = vld [vmem:[%s1 + $0x4] sm:$0xf]
  %v69 = vld [vmem:[%s1 + $0x8] sm:$0xf]
  %v70 = vld [vmem:[%s1 + $0xc] sm:$0xf]
  %v71 = vld [vmem:[%s1 + $0x10] sm:$0xf]
  %v72 = vld [vmem:[%s1 + $0x14] sm:$0xf]
  %v73 = vld [vmem:[%s1 + $0x18] sm:$0xf]
  %v74 = vld [vmem:[%s1 + $0x1c] sm:$0xf]
  %v75 = vld [vmem:[%s1 + $0x20] sm:$0xf]
  %v76 = vld [vmem:[%s1 + $0x24] sm:$0xf]
  %v77 = vld [vmem:[%s1 + $0x28] sm:$0xf]
  %v78 = vld [vmem:[%s1 + $0x2c] sm:$0xf]
  %v79 = vld [vmem:[%s1 + $0x30] sm:$0xf]
  %v80 = vld [vmem:[%s1 + $0x34] sm:$0xf]
  %v81 = vld [vmem:[%s1 + $0x38] sm:$0xf]
  %v82 = vld [vmem:[%s1 + $0x3c] sm:$0xf]
  %v83 = vld [vmem:[%s1 + $0x40] sm:$0xf]
  %v84 = vld [vmem:[%s1 + $0x44] sm:$0xf]
  %v85 = vld [vmem:[%s1 + $0x48] sm:$0xf]
  %v86 = vld [vmem:[%s1 + $0x4c] sm:$0xf]
  %v87 = vld [vmem:[%s1 + $0x50] sm:$0xf]
  %v88 = vld [vmem:[%s1 + $0x54] sm:$0xf]
  %v89 = vld [vmem:[%s1 + $0x58] sm:$0xf]
  %v90 = vld [vmem:[%s1 + $0x5c] sm:$0xf]
  %v91 = vld [vmem:[%s1 + $0x60] sm:$0xf]
  %v92 = vld [vmem:[%s1 + $0x64] sm:$0xf]
  %v93 = vld [vmem:[%s1 + $0x68] sm:$0xf]
  %v94 = vld [vmem:[%s1 + $0x6c] sm:$0xf]
  %v95 = vld [vmem:[%s1 + $0x70] sm:$0xf]
  %v96 = vld [vmem:[%s1 + $0x74] sm:$0xf]
  %v97 = vld [vmem:[%s1 + $0x78] sm:$0xf]
  %v98 = vld [vmem:[%s1 + $0x7c] sm:$0xf]
  %v115 = vunpack.c.l.b16 %v51
  %v116 = vunpack.c.h.b16 %v51
  %v117 = vunpack.c.l.b16 %v52
  %v118 = vunpack.c.h.b16 %v52
  %v119 = vunpack.c.l.b16 %v53
  %v120 = vunpack.c.h.b16 %v53
  %v121 = vunpack.c.l.b16 %v54
  %v122 = vunpack.c.h.b16 %v54
  %v123 = vunpack.c.l.b16 %v55
  %v124 = vunpack.c.h.b16 %v55
  %v125 = vunpack.c.l.b16 %v56
  %v126 = vunpack.c.h.b16 %v56
  %v127 = vunpack.c.l.b16 %v57
  %v128 = vunpack.c.h.b16 %v57
  %v129 = vunpack.c.l.b16 %v58
  %v130 = vunpack.c.h.b16 %v58
  %v131 = vunpack.c.l.b16 %v59
  %v132 = vunpack.c.h.b16 %v59
  %v133 = vunpack.c.l.b16 %v60
  %v134 = vunpack.c.h.b16 %v60
  %v135 = vunpack.c.l.b16 %v61
  %v136 = vunpack.c.h.b16 %v61
  %v137 = vunpack.c.l.b16 %v62
  %v138 = vunpack.c.h.b16 %v62
  %v139 = vunpack.c.l.b16 %v63
  %v140 = vunpack.c.h.b16 %v63
  %v141 = vunpack.c.l.b16 %v64
  %v142 = vunpack.c.h.b16 %v64
  %v143 = vunpack.c.l.b16 %v65
  %v144 = vunpack.c.h.b16 %v65
  %v145 = vunpack.c.l.b16 %v66
  %v146 = vunpack.c.h.b16 %v66
  %v147 = vpack.c.b16 %v117, %v115
  %v148 = vpack.c.b16 %v118, %v116
  %v149 = vpack.c.b16 %v121, %v119
  %v150 = vpack.c.b16 %v122, %v120
  %v151 = vpack.c.b16 %v125, %v123
  %v152 = vpack.c.b16 %v126, %v124
  %v153 = vpack.c.b16 %v129, %v127
  %v154 = vpack.c.b16 %v130, %v128
  %v155 = vpack.c.b16 %v133, %v131
  %v156 = vpack.c.b16 %v134, %v132
  %v157 = vpack.c.b16 %v137, %v135
  %v158 = vpack.c.b16 %v138, %v136
  %v159 = vpack.c.b16 %v141, %v139
  %v160 = vpack.c.b16 %v142, %v140
  %v161 = vpack.c.b16 %v145, %v143
  %v162 = vpack.c.b16 %v146, %v144
  %v211 = vunpack.c.l.b16 %v67
  %v212 = vunpack.c.l.b16 %v68
  %v213 = vunpack.c.l.b16 %v69
  %v214 = vunpack.c.l.b16 %v70
  %v215 = vunpack.c.l.b16 %v71
  %v216 = vunpack.c.l.b16 %v72
  %v217 = vunpack.c.l.b16 %v73
  %v218 = vunpack.c.l.b16 %v74
  %v219 = vunpack.c.l.b16 %v75
  %v220 = vunpack.c.l.b16 %v76
  %v221 = vunpack.c.l.b16 %v77
  %v222 = vunpack.c.l.b16 %v78
  %v223 = vunpack.c.l.b16 %v79
  %v224 = vunpack.c.l.b16 %v80
  %v225 = vunpack.c.l.b16 %v81
  %v226 = vunpack.c.l.b16 %v82
  %v227 = vunpack.c.l.b16 %v83
  %v228 = vunpack.c.l.b16 %v84
  %v229 = vunpack.c.l.b16 %v85
  %v230 = vunpack.c.l.b16 %v86
  %v231 = vunpack.c.l.b16 %v87
  %v232 = vunpack.c.l.b16 %v88
  %v233 = vunpack.c.l.b16 %v89
  %v234 = vunpack.c.l.b16 %v90
  %v235 = vunpack.c.l.b16 %v91
  %v236 = vunpack.c.l.b16 %v92
  %v237 = vunpack.c.l.b16 %v93
  %v238 = vunpack.c.l.b16 %v94
  %v239 = vunpack.c.l.b16 %v95
  %v240 = vunpack.c.l.b16 %v96
  %v241 = vunpack.c.l.b16 %v97
  %v242 = vunpack.c.l.b16 %v98
  %v243 = vpack.c.b16 %v212, %v211
  %v244 = vpack.c.b16 %v214, %v213
  %v245 = vpack.c.b16 %v216, %v215
  %v246 = vpack.c.b16 %v218, %v217
  %v247 = vpack.c.b16 %v220, %v219
  %v248 = vpack.c.b16 %v222, %v221
  %v249 = vpack.c.b16 %v224, %v223
  %v250 = vpack.c.b16 %v226, %v225
  %v251 = vpack.c.b16 %v228, %v227
  %v252 = vpack.c.b16 %v230, %v229
  %v253 = vpack.c.b16 %v232, %v231
  %v254 = vpack.c.b16 %v234, %v233
  %v255 = vpack.c.b16 %v236, %v235
  %v256 = vpack.c.b16 %v238, %v237
  %v257 = vpack.c.b16 %v240, %v239
  %v258 = vpack.c.b16 %v242, %v241
  %275 = vmatprep.subr.bf16.mxu0 0
  %276 = vmatpush1.bf16.msra.mxu0 %v250
  %277 = vmatprep.subr.bf16.mxu0 0
  %278 = vmatpush1.bf16.msra.mxu0 %v249
  %279 = vmatprep.subr.bf16.mxu0 0
  %280 = vmatpush1.bf16.msra.mxu0 %v248
  %281 = vmatprep.subr.bf16.mxu0 0
  %282 = vmatpush1.bf16.msra.mxu0 %v247
  %283 = vmatprep.subr.bf16.mxu0 0
  %284 = vmatpush1.bf16.msra.mxu0 %v246
  %285 = vmatprep.subr.bf16.mxu0 0
  %286 = vmatpush1.bf16.msra.mxu0 %v245
  %287 = vmatprep.subr.bf16.mxu0 0
  %288 = vmatpush1.bf16.msra.mxu0 %v244
  %289 = vmatprep.subr.bf16.mxu0 0
  %290 = vmatpush1.bf16.msra.mxu0 %v243
  %291 = vmatprep.subr.bf16.mxu0 0
  %292 = vmatpush2.bf16.msra.mxu0 %v258
  %293 = vmatprep.subr.bf16.mxu0 0
  %294 = vmatpush2.bf16.msra.mxu0 %v257
  %295 = vmatprep.subr.bf16.mxu0 0
  %296 = vmatpush2.bf16.msra.mxu0 %v256
  %297 = vmatprep.subr.bf16.mxu0 0
  %298 = vmatpush2.bf16.msra.mxu0 %v255
  %299 = vmatprep.subr.bf16.mxu0 0
  %300 = vmatpush2.bf16.msra.mxu0 %v254
  %301 = vmatprep.subr.bf16.mxu0 0
  %302 = vmatpush2.bf16.msra.mxu0 %v253
  %303 = vmatprep.subr.bf16.mxu0 0
  %304 = vmatpush2.bf16.msra.mxu0 %v252
  %305 = vmatprep.subr.bf16.mxu0 0
  %306 = vmatpush2.bf16.msra.mxu0 %v251
  %307 = vmatprep.mubr.bf16.mxu0 %v148
  %308 = vmatmul.mubr.bf16.gmra.mxu0 %v147
  %v309 = vpop.f32.mrf.mxu0
  %v310 = vadd.f32 0.0, %v309
  %v311 = vpop.f32.mrf.mxu0
  %v312 = vpop.f32.mrf.mxu0
  %v313 = vadd.f32 0.0, %v312
  %v314 = vpop.f32.mrf.mxu0
  %315 = vmatprep.mubr.bf16.mxu0 %v150
  %316 = vmatmul.mubr.bf16.gmra.mxu0 %v149
  %v317 = vpop.f32.mrf.mxu0
  %v318 = vadd.f32 0.0, %v317
  %v319 = vpop.f32.mrf.mxu0
  %v320 = vpop.f32.mrf.mxu0
  %v321 = vadd.f32 0.0, %v320
  %v322 = vpop.f32.mrf.mxu0
  %323 = vmatprep.mubr.bf16.mxu0 %v152
  %324 = vmatmul.mubr.bf16.gmra.mxu0 %v151
  %v325 = vpop.f32.mrf.mxu0
  %v326 = vadd.f32 0.0, %v325
  %v327 = vpop.f32.mrf.mxu0
  %v328 = vpop.f32.mrf.mxu0
  %v329 = vadd.f32 0.0, %v328
  %v330 = vpop.f32.mrf.mxu0
  %331 = vmatprep.mubr.bf16.mxu0 %v154
  %332 = vmatmul.mubr.bf16.gmra.mxu0 %v153
  %v333 = vpop.f32.mrf.mxu0
  %v334 = vadd.f32 0.0, %v333
  %v335 = vpop.f32.mrf.mxu0
  %v336 = vpop.f32.mrf.mxu0
  %v337 = vadd.f32 0.0, %v336
  %v338 = vpop.f32.mrf.mxu0
  %339 = vmatprep.mubr.bf16.mxu0 %v156
  %340 = vmatmul.mubr.bf16.gmra.mxu0 %v155
  %v341 = vpop.f32.mrf.mxu0
  %v342 = vadd.f32 0.0, %v341
  %v343 = vpop.f32.mrf.mxu0
  %v344 = vpop.f32.mrf.mxu0
  %v345 = vadd.f32 0.0, %v344
  %v346 = vpop.f32.mrf.mxu0
  %347 = vmatprep.mubr.bf16.mxu0 %v158
  %348 = vmatmul.mubr.bf16.gmra.mxu0 %v157
  %v349 = vpop.f32.mrf.mxu0
  %v350 = vadd.f32 0.0, %v349
  %v351 = vpop.f32.mrf.mxu0
  %v352 = vpop.f32.mrf.mxu0
  %v353 = vadd.f32 0.0, %v352
  %v354 = vpop.f32.mrf.mxu0
  %355 = vmatprep.mubr.bf16.mxu0 %v160
  %356 = vmatmul.mubr.bf16.gmra.mxu0 %v159
  %v357 = vpop.f32.mrf.mxu0
  %v358 = vadd.f32 0.0, %v357
  %v359 = vpop.f32.mrf.mxu0
  %v360 = vpop.f32.mrf.mxu0
  %v361 = vadd.f32 0.0, %v360
  %v362 = vpop.f32.mrf.mxu0
  %363 = vmatprep.mubr.bf16.mxu0 %v162
  %364 = vmatmul.mubr.bf16.gmra.mxu0 %v161
  %v365 = vpop.f32.mrf.mxu0
  %v366 = vadd.f32 0.0, %v365
  %v367 = vpop.f32.mrf.mxu0
  %v368 = vpop.f32.mrf.mxu0
  %v369 = vadd.f32 0.0, %v368
  %v370 = vpop.f32.mrf.mxu0
  %371 = vdwg.mxu0
  %v372 = vadd.f32 %v35, %v310
  %v373 = vadd.f32 %v36, %v313
  %v374 = vadd.f32 %v37, %v318
  %v375 = vadd.f32 %v38, %v321
  %v376 = vadd.f32 %v39, %v326
  %v377 = vadd.f32 %v40, %v329
  %v378 = vadd.f32 %v41, %v334
  %v379 = vadd.f32 %v42, %v337
  %v380 = vadd.f32 %v43, %v342
  %v381 = vadd.f32 %v44, %v345
  %v382 = vadd.f32 %v45, %v350
  %v383 = vadd.f32 %v46, %v353
  %v384 = vadd.f32 %v47, %v358
  %v385 = vadd.f32 %v48, %v361
  %v386 = vadd.f32 %v49, %v366
  %v387 = vadd.f32 %v50, %v369
  %388 = vst [vmem:[#allocation2] sm:$0xff] %v372
  %389 = vst [vmem:[#allocation2 + $0x8] sm:$0xff] %v373
  %390 = vst [vmem:[#allocation2 + $0x10] sm:$0xff] %v374
  %391 = vst [vmem:[#allocation2 + $0x18] sm:$0xff] %v375
  %392 = vst [vmem:[#allocation2 + $0x20] sm:$0xff] %v376
  %393 = vst [vmem:[#allocation2 + $0x28] sm:$0xff] %v377
  %394 = vst [vmem:[#allocation2 + $0x30] sm:$0xff] %v378
  %395 = vst [vmem:[#allocation2 + $0x38] sm:$0xff] %v379
  %396 = vst [vmem:[#allocation2 + $0x40] sm:$0xff] %v380
  %397 = vst [vmem:[#allocation2 + $0x48] sm:$0xff] %v381
  %398 = vst [vmem:[#allocation2 + $0x50] sm:$0xff] %v382
  %399 = vst [vmem:[#allocation2 + $0x58] sm:$0xff] %v383
  %400 = vst [vmem:[#allocation2 + $0x60] sm:$0xff] %v384
  %401 = vst [vmem:[#allocation2 + $0x68] sm:$0xff] %v385
  %402 = vst [vmem:[#allocation2 + $0x70] sm:$0xff] %v386
  %403 = vst [vmem:[#allocation2 + $0x78] sm:$0xff] %v387
  // Predicated region
  $region18: #{bottleneck_forward.8} parent=0 // pred_check
    %p404 = pneg %p15
  $region19: #{bottleneck_forward.8} parent=0 // pred_check_branch
    %406 = sbr.rel (%p404) target = $region21
  $region20: #{bottleneck_forward.8} parent=0 // pred_region
    %v407 = vld [vmem:[#allocation2] sm:$0xff]
    %v408 = vld [vmem:[#allocation2 + $0x8] sm:$0xff]
    %v409 = vld [vmem:[#allocation2 + $0x10] sm:$0xff]
    %v410 = vld [vmem:[#allocation2 + $0x18] sm:$0xff]
    %v411 = vld [vmem:[#allocation2 + $0x20] sm:$0xff]
    %v412 = vld [vmem:[#allocation2 + $0x28] sm:$0xff]
    %v413 = vld [vmem:[#allocation2 + $0x30] sm:$0xff]
    %v414 = vld [vmem:[#allocation2 + $0x38] sm:$0xff]
    %v415 = vld [vmem:[#allocation2 + $0x40] sm:$0xff]
    %v416 = vld [vmem:[#allocation2 + $0x48] sm:$0xff]
    %v417 = vld [vmem:[#allocation2 + $0x50] sm:$0xff]
    %v418 = vld [vmem:[#allocation2 + $0x58] sm:$0xff]
    %v419 = vld [vmem:[#allocation2 + $0x60] sm:$0xff]
    %v420 = vld [vmem:[#allocation2 + $0x68] sm:$0xff]
    %v421 = vld [vmem:[#allocation2 + $0x70] sm:$0xff]
    %v422 = vld [vmem:[#allocation2 + $0x78] sm:$0xff]
    %v423 = vld [vmem:[%s2] sm:$0x1]
    %v425 = vlaneseq
    %v426 = vshrl.u32 %v425, 7
    %v427 = vsub.s32 0, %v426
    %v428 = vrot.slane %v423, %v427
    %v430 = vadd.f32 %v407, %v428
    %v431 = vadd.f32 %v408, %v428
    %v432 = vadd.f32 %v409, %v428
    %v433 = vadd.f32 %v410, %v428
    %v434 = vadd.f32 %v411, %v428
    %v435 = vadd.f32 %v412, %v428
    %v436 = vadd.f32 %v413, %v428
    %v437 = vadd.f32 %v414, %v428
    %v438 = vadd.f32 %v415, %v428
    %v439 = vadd.f32 %v416, %v428
    %v440 = vadd.f32 %v417, %v428
    %v441 = vadd.f32 %v418, %v428
    %v442 = vadd.f32 %v419, %v428
    %v443 = vadd.f32 %v420, %v428
    %v444 = vadd.f32 %v421, %v428
    %v445 = vadd.f32 %v422, %v428
    %v446 = vmax.f32 %v430, 0.0
    %v447 = vmax.f32 %v431, 0.0
    %v448 = vmax.f32 %v432, 0.0
    %v449 = vmax.f32 %v433, 0.0
    %v450 = vmax.f32 %v434, 0.0
    %v451 = vmax.f32 %v435, 0.0
    %v452 = vmax.f32 %v436, 0.0
    %v453 = vmax.f32 %v437, 0.0
    %v454 = vmax.f32 %v438, 0.0
    %v455 = vmax.f32 %v439, 0.0
    %v456 = vmax.f32 %v440, 0.0
    %v457 = vmax.f32 %v441, 0.0
    %v458 = vmax.f32 %v442, 0.0
    %v459 = vmax.f32 %v443, 0.0
    %v460 = vmax.f32 %v444, 0.0
    %v461 = vmax.f32 %v445, 0.0
    %v462 = vpack.c.bf16 %v447, %v446
    %v463 = vpack.c.bf16 %v449, %v448
    %v464 = vpack.c.bf16 %v451, %v450
    %v465 = vpack.c.bf16 %v453, %v452
    %v466 = vpack.c.bf16 %v455, %v454
    %v467 = vpack.c.bf16 %v457, %v456
    %v468 = vpack.c.bf16 %v459, %v458
    %v469 = vpack.c.bf16 %v461, %v460
    %v478 = vunpack.c.l.b16 %v462
    %v479 = vunpack.c.h.b16 %v462
    %v480 = vunpack.c.l.b16 %v463
    %v481 = vunpack.c.h.b16 %v463
    %v482 = vunpack.c.l.b16 %v464
    %v483 = vunpack.c.h.b16 %v464
    %v484 = vunpack.c.l.b16 %v465
    %v485 = vunpack.c.h.b16 %v465
    %v486 = vunpack.c.l.b16 %v466
    %v487 = vunpack.c.h.b16 %v466
    %v488 = vunpack.c.l.b16 %v467
    %v489 = vunpack.c.h.b16 %v467
    %v490 = vunpack.c.l.b16 %v468
    %v491 = vunpack.c.h.b16 %v468
    %v492 = vunpack.c.l.b16 %v469
    %v493 = vunpack.c.h.b16 %v469
    %v494 = vpack.c.b16 %v478, %v478
    %v495 = vpack.c.b16 %v479, %v479
    %v496 = vpack.c.b16 %v480, %v480
    %v497 = vpack.c.b16 %v481, %v481
    %v498 = vpack.c.b16 %v482, %v482
    %v499 = vpack.c.b16 %v483, %v483
    %v500 = vpack.c.b16 %v484, %v484
    %v501 = vpack.c.b16 %v485, %v485
    %v502 = vpack.c.b16 %v486, %v486
    %v503 = vpack.c.b16 %v487, %v487
    %v504 = vpack.c.b16 %v488, %v488
    %v505 = vpack.c.b16 %v489, %v489
    %v506 = vpack.c.b16 %v490, %v490
    %v507 = vpack.c.b16 %v491, %v491
    %v508 = vpack.c.b16 %v492, %v492
    %v509 = vpack.c.b16 %v493, %v493
    %526 = vst [vmem:[%s3] sm:$0xf] %v494
    %527 = vst [vmem:[%s3 + $0x4] sm:$0xf] %v495
    %528 = vst [vmem:[%s3 + $0x8] sm:$0xf] %v496
    %529 = vst [vmem:[%s3 + $0xc] sm:$0xf] %v497
    %530 = vst [vmem:[%s3 + $0x10] sm:$0xf] %v498
    %531 = vst [vmem:[%s3 + $0x14] sm:$0xf] %v499
    %532 = vst [vmem:[%s3 + $0x18] sm:$0xf] %v500
    %533 = vst [vmem:[%s3 + $0x1c] sm:$0xf] %v501
    %534 = vst [vmem:[%s3 + $0x20] sm:$0xf] %v502
    %535 = vst [vmem:[%s3 + $0x24] sm:$0xf] %v503
    %536 = vst [vmem:[%s3 + $0x28] sm:$0xf] %v504
    %537 = vst [vmem:[%s3 + $0x2c] sm:$0xf] %v505
    %538 = vst [vmem:[%s3 + $0x30] sm:$0xf] %v506
    %539 = vst [vmem:[%s3 + $0x34] sm:$0xf] %v507
    %540 = vst [vmem:[%s3 + $0x38] sm:$0xf] %v508
    %541 = vst [vmem:[%s3 + $0x3c] sm:$0xf] %v509
  $region21: #{bottleneck_forward.8} parent=0 // pred_fallthru
    _
  // Predicated region
  $region22: #{bottleneck_forward.8} parent=0 // pred_check
    _
  $region23: #{bottleneck_forward.8} parent=0 // pred_check_branch
    %543 = sbr.rel (0) target = $region25
  $region24: #{bottleneck_forward.8} parent=0 // pred_region
    _
  $region25: #{bottleneck_forward.8} parent=0 // pred_fallthru
    _
  // Predicated region
  $region26: #{bottleneck_forward.8} parent=0 // pred_check
    _
  $region27: #{bottleneck_forward.8} parent=0 // pred_check_branch
    %545 = sbr.rel (0) target = $region29
  $region28: #{bottleneck_forward.8} parent=0 // pred_region
    _
  $region29: #{bottleneck_forward.8} parent=0 // pred_fallthru
    _

// kernel: bottleneck_forward.11
$region0: #{bottleneck_forward.11}
  #allocation0 [shape = 'u32[]', space=smem, size = 0x4, offset = 0x4, fixed_abs, tag = 'smem constant byte address 0x4 - core index']
  #allocation1 [shape = 'u32[144,128]{1,0:T(1,128)}', space=vmem, size = 0x12000, scoped, tag = 'internal scratch']
  #allocation2 [shape = 'f32[128,128]{1,0:T(8,128)}', space=vmem, size = 0x10000, scoped, tag = 'scratch operand']
  %s0 = inlined_call_operand.vmem [shape: bf16[128,128], index: 0, kind: input, shape index: {}]
  %s1 = inlined_call_operand.vmem [shape: bf16[128,128], index: 1, kind: input, shape index: {}]
  %s2 = inlined_call_operand.vmem [shape: f32[1,128], index: 2, kind: input, shape index: {}]
  %s3 = inlined_call_operand.vmem [shape: bf16[128,128], index: 3, kind: input, shape index: {}]
  %s4 = inlined_call_operand.hbm [shape: f32[128,128], index: 4, kind: output, shape index: {}]
  %s5 = sld [smem:[#allocation0]]
  $region34: #{bottleneck_forward.11} parent=0
    _
  %s7 = ssub.s32 1, %s5
  %s8 = scalar_select 0, %s7, %s5
  $region1: #{bottleneck_forward.11} parent=0
    #allocation3 [shape = 'u8[65536]{0}', space=vmem, size = 0x10000, scoped, tag = 'output window, operand 0, single buffered']
    #allocation4 [shape = 's32[1]{0}', space=sflag, size = 0x4, scoped, tag = 'scoped memory for bottleneck_forward.11']
    %9 = vsyncpa [#allocation4], 0
    // Predicated region
    $region2: #{bottleneck_forward.11} parent=1 // pred_check
      _
    $region3: #{bottleneck_forward.11} parent=1 // pred_check_branch
      %11 = sbr.rel (0) target = $region5
    $region4: #{bottleneck_forward.11} parent=1 // pred_region
      _
    $region5: #{bottleneck_forward.11} parent=1 // pred_fallthru
      _
    // Predicated region
    $region6: #{bottleneck_forward.11} parent=1 // pred_check
      _
    $region7: #{bottleneck_forward.11} parent=1 // pred_check_branch
      %13 = sbr.rel (0) target = $region9
    $region8: #{bottleneck_forward.11} parent=1 // pred_region
      _
    $region9: #{bottleneck_forward.11} parent=1 // pred_fallthru
      _
    // Predicated region
    $region10: #{bottleneck_forward.11} parent=1 // pred_check
      _
    $region11: #{bottleneck_forward.11} parent=1 // pred_check_branch
      %15 = sbr.rel (0) target = $region13
    $region12: #{bottleneck_forward.11} parent=1 // pred_region
      _
    $region13: #{bottleneck_forward.11} parent=1 // pred_fallthru
      _
    // Predicated region
    $region14: #{bottleneck_forward.11} parent=1 // pred_check
      _
    $region15: #{bottleneck_forward.11} parent=1 // pred_check_branch
      %17 = sbr.rel (0) target = $region17
    $region16: #{bottleneck_forward.11} parent=1 // pred_region
      _
    $region17: #{bottleneck_forward.11} parent=1 // pred_fallthru
      _
    %p19 = scmp.eq.s32.totalorder 0, 0
    // Predicated region
    $region18: #{bottleneck_forward.11} parent=1 // pred_check
      %p20 = pneg %p19
    $region19: #{bottleneck_forward.11} parent=1 // pred_check_branch
      %22 = sbr.rel (%p20) target = $region21
    $region20: #{bottleneck_forward.11} parent=1 // pred_region
      %23 = vst [vmem:[#allocation2] sm:$0xff] 0.0
      %24 = vst [vmem:[#allocation2 + $0x8] sm:$0xff] 0.0
      %25 = vst [vmem:[#allocation2 + $0x10] sm:$0xff] 0.0
      %26 = vst [vmem:[#allocation2 + $0x18] sm:$0xff] 0.0
      %27 = vst [vmem:[#allocation2 + $0x20] sm:$0xff] 0.0
      %28 = vst [vmem:[#allocation2 + $0x28] sm:$0xff] 0.0
      %29 = vst [vmem:[#allocation2 + $0x30] sm:$0xff] 0.0
      %30 = vst [vmem:[#allocation2 + $0x38] sm:$0xff] 0.0
      %31 = vst [vmem:[#allocation2 + $0x40] sm:$0xff] 0.0
      %32 = vst [vmem:[#allocation2 + $0x48] sm:$0xff] 0.0
      %33 = vst [vmem:[#allocation2 + $0x50] sm:$0xff] 0.0
      %34 = vst [vmem:[#allocation2 + $0x58] sm:$0xff] 0.0
      %35 = vst [vmem:[#allocation2 + $0x60] sm:$0xff] 0.0
      %36 = vst [vmem:[#allocation2 + $0x68] sm:$0xff] 0.0
      %37 = vst [vmem:[#allocation2 + $0x70] sm:$0xff] 0.0
      %38 = vst [vmem:[#allocation2 + $0x78] sm:$0xff] 0.0
    $region21: #{bottleneck_forward.11} parent=1 // pred_fallthru
      _
    %v39 = vld [vmem:[#allocation2] sm:$0xff]
    %v40 = vld [vmem:[#allocation2 + $0x8] sm:$0xff]
    %v41 = vld [vmem:[#allocation2 + $0x10] sm:$0xff]
    %v42 = vld [vmem:[#allocation2 + $0x18] sm:$0xff]
    %v43 = vld [vmem:[#allocation2 + $0x20] sm:$0xff]
    %v44 = vld [vmem:[#allocation2 + $0x28] sm:$0xff]
    %v45 = vld [vmem:[#allocation2 + $0x30] sm:$0xff]
    %v46 = vld [vmem:[#allocation2 + $0x38] sm:$0xff]
    %v47 = vld [vmem:[#allocation2 + $0x40] sm:$0xff]
    %v48 = vld [vmem:[#allocation2 + $0x48] sm:$0xff]
    %v49 = vld [vmem:[#allocation2 + $0x50] sm:$0xff]
    %v50 = vld [vmem:[#allocation2 + $0x58] sm:$0xff]
    %v51 = vld [vmem:[#allocation2 + $0x60] sm:$0xff]
    %v52 = vld [vmem:[#allocation2 + $0x68] sm:$0xff]
    %v53 = vld [vmem:[#allocation2 + $0x70] sm:$0xff]
    %v54 = vld [vmem:[#allocation2 + $0x78] sm:$0xff]
    %v55 = vld [vmem:[%s0] sm:$0xf]
    %v56 = vld [vmem:[%s0 + $0x4] sm:$0xf]
    %v57 = vld [vmem:[%s0 + $0x8] sm:$0xf]
    %v58 = vld [vmem:[%s0 + $0xc] sm:$0xf]
    %v59 = vld [vmem:[%s0 + $0x10] sm:$0xf]
    %v60 = vld [vmem:[%s0 + $0x14] sm:$0xf]
    %v61 = vld [vmem:[%s0 + $0x18] sm:$0xf]
    %v62 = vld [vmem:[%s0 + $0x1c] sm:$0xf]
    %v63 = vld [vmem:[%s0 + $0x20] sm:$0xf]
    %v64 = vld [vmem:[%s0 + $0x24] sm:$0xf]
    %v65 = vld [vmem:[%s0 + $0x28] sm:$0xf]
    %v66 = vld [vmem:[%s0 + $0x2c] sm:$0xf]
    %v67 = vld [vmem:[%s0 + $0x30] sm:$0xf]
    %v68 = vld [vmem:[%s0 + $0x34] sm:$0xf]
    %v69 = vld [vmem:[%s0 + $0x38] sm:$0xf]
    %v70 = vld [vmem:[%s0 + $0x3c] sm:$0xf]
    %v71 = vld [vmem:[%s1] sm:$0xf]
    %v72 = vld [vmem:[%s1 + $0x4] sm:$0xf]
    %v73 = vld [vmem:[%s1 + $0x8] sm:$0xf]
    %v74 = vld [vmem:[%s1 + $0xc] sm:$0xf]
    %v75 = vld [vmem:[%s1 + $0x10] sm:$0xf]
    %v76 = vld [vmem:[%s1 + $0x14] sm:$0xf]
    %v77 = vld [vmem:[%s1 + $0x18] sm:$0xf]
    %v78 = vld [vmem:[%s1 + $0x1c] sm:$0xf]
    %v79 = vld [vmem:[%s1 + $0x20] sm:$0xf]
    %v80 = vld [vmem:[%s1 + $0x24] sm:$0xf]
    %v81 = vld [vmem:[%s1 + $0x28] sm:$0xf]
    %v82 = vld [vmem:[%s1 + $0x2c] sm:$0xf]
    %v83 = vld [vmem:[%s1 + $0x30] sm:$0xf]
    %v84 = vld [vmem:[%s1 + $0x34] sm:$0xf]
    %v85 = vld [vmem:[%s1 + $0x38] sm:$0xf]
    %v86 = vld [vmem:[%s1 + $0x3c] sm:$0xf]
    %v103 = vunpack.c.l.b16 %v55
    %v104 = vunpack.c.l.b16 %v56
    %v105 = vunpack.c.l.b16 %v57
    %v106 = vunpack.c.l.b16 %v58
    %v107 = vunpack.c.l.b16 %v59
    %v108 = vunpack.c.l.b16 %v60
    %v109 = vunpack.c.l.b16 %v61
    %v110 = vunpack.c.l.b16 %v62
    %v111 = vunpack.c.l.b16 %v63
    %v112 = vunpack.c.l.b16 %v64
    %v113 = vunpack.c.l.b16 %v65
    %v114 = vunpack.c.l.b16 %v66
    %v115 = vunpack.c.l.b16 %v67
    %v116 = vunpack.c.l.b16 %v68
    %v117 = vunpack.c.l.b16 %v69
    %v118 = vunpack.c.l.b16 %v70
    %v119 = vpack.c.b16 %v104, %v103
    %v120 = vpack.c.b16 %v106, %v105
    %v121 = vpack.c.b16 %v108, %v107
    %v122 = vpack.c.b16 %v110, %v109
    %v123 = vpack.c.b16 %v112, %v111
    %v124 = vpack.c.b16 %v114, %v113
    %v125 = vpack.c.b16 %v116, %v115
    %v126 = vpack.c.b16 %v118, %v117
    %v151 = vunpack.c.l.b16 %v71
    %v152 = vunpack.c.l.b16 %v72
    %v153 = vunpack.c.l.b16 %v73
    %v154 = vunpack.c.l.b16 %v74
    %v155 = vunpack.c.l.b16 %v75
    %v156 = vunpack.c.l.b16 %v76
    %v157 = vunpack.c.l.b16 %v77
    %v158 = vunpack.c.l.b16 %v78
    %v159 = vunpack.c.l.b16 %v79
    %v160 = vunpack.c.l.b16 %v80
    %v161 = vunpack.c.l.b16 %v81
    %v162 = vunpack.c.l.b16 %v82
    %v163 = vunpack.c.l.b16 %v83
    %v164 = vunpack.c.l.b16 %v84
    %v165 = vunpack.c.l.b16 %v85
    %v166 = vunpack.c.l.b16 %v86
    %v167 = vpack.c.b16 %v152, %v151
    %v168 = vpack.c.b16 %v154, %v153
    %v169 = vpack.c.b16 %v156, %v155
    %v170 = vpack.c.b16 %v158, %v157
    %v171 = vpack.c.b16 %v160, %v159
    %v172 = vpack.c.b16 %v162, %v161
    %v173 = vpack.c.b16 %v164, %v163
    %v174 = vpack.c.b16 %v166, %v165
    %183 = vmatprep.subr.bf16.mxu0 0
    %184 = vmatpush1.bf16.msra.mxu0 %v174
    %185 = vmatprep.subr.bf16.mxu0 0
    %186 = vmatpush1.bf16.msra.mxu0 %v173
    %187 = vmatprep.subr.bf16.mxu0 0
    %188 = vmatpush1.bf16.msra.mxu0 %v172
    %189 = vmatprep.subr.bf16.mxu0 0
    %190 = vmatpush1.bf16.msra.mxu0 %v171
    %191 = vmatprep.subr.bf16.mxu0 0
    %192 = vmatpush1.bf16.msra.mxu0 %v170
    %193 = vmatprep.subr.bf16.mxu0 0
    %194 = vmatpush1.bf16.msra.mxu0 %v169
    %195 = vmatprep.subr.bf16.mxu0 0
    %196 = vmatpush1.bf16.msra.mxu0 %v168
    %197 = vmatprep.subr.bf16.mxu0 0
    %198 = vmatpush1.bf16.msra.mxu0 %v167
    %199 = vmatprep.subr.bf16.mxu0 0
    %200 = vmatpush2.bf16.msra.mxu0 0
    %201 = vmatprep.subr.bf16.mxu0 0
    %202 = vmatpush2.bf16.msra.mxu0 0
    %203 = vmatprep.subr.bf16.mxu0 0
    %204 = vmatpush2.bf16.msra.mxu0 0
    %205 = vmatprep.subr.bf16.mxu0 0
    %206 = vmatpush2.bf16.msra.mxu0 0
    %207 = vmatprep.subr.bf16.mxu0 0
    %208 = vmatpush2.bf16.msra.mxu0 0
    %209 = vmatprep.subr.bf16.mxu0 0
    %210 = vmatpush2.bf16.msra.mxu0 0
    %211 = vmatprep.subr.bf16.mxu0 0
    %212 = vmatpush2.bf16.msra.mxu0 0
    %213 = vmatprep.subr.bf16.mxu0 0
    %214 = vmatpush2.bf16.msra.mxu0 0
    %215 = vmatprep.mubr.bf16.mxu0 0
    %216 = vmatmul.mubr.bf16.gmra.mxu0 %v119
    %v217 = vpop.f32.mrf.mxu0
    %v218 = vadd.f32 0.0, %v217
    %v219 = vpop.f32.mrf.mxu0
    %v220 = vpop.f32.mrf.mxu0
    %v221 = vadd.f32 0.0, %v220
    %v222 = vpop.f32.mrf.mxu0
    %223 = vmatprep.mubr.bf16.mxu0 0
    %224 = vmatmul.mubr.bf16.gmra.mxu0 %v120
    %v225 = vpop.f32.mrf.mxu0
    %v226 = vadd.f32 0.0, %v225
    %v227 = vpop.f32.mrf.mxu0
    %v228 = vpop.f32.mrf.mxu0
    %v229 = vadd.f32 0.0, %v228
    %v230 = vpop.f32.mrf.mxu0
    %231 = vmatprep.mubr.bf16.mxu0 0
    %232 = vmatmul.mubr.bf16.gmra.mxu0 %v121
    %v233 = vpop.f32.mrf.mxu0
    %v234 = vadd.f32 0.0, %v233
    %v235 = vpop.f32.mrf.mxu0
    %v236 = vpop.f32.mrf.mxu0
    %v237 = vadd.f32 0.0, %v236
    %v238 = vpop.f32.mrf.mxu0
    %239 = vmatprep.mubr.bf16.mxu0 0
    %240 = vmatmul.mubr.bf16.gmra.mxu0 %v122
    %v241 = vpop.f32.mrf.mxu0
    %v242 = vadd.f32 0.0, %v241
    %v243 = vpop.f32.mrf.mxu0
    %v244 = vpop.f32.mrf.mxu0
    %v245 = vadd.f32 0.0, %v244
    %v246 = vpop.f32.mrf.mxu0
    %247 = vmatprep.mubr.bf16.mxu0 0
    %248 = vmatmul.mubr.bf16.gmra.mxu0 %v123
    %v249 = vpop.f32.mrf.mxu0
    %v250 = vadd.f32 0.0, %v249
    %v251 = vpop.f32.mrf.mxu0
    %v252 = vpop.f32.mrf.mxu0
    %v253 = vadd.f32 0.0, %v252
    %v254 = vpop.f32.mrf.mxu0
    %255 = vmatprep.mubr.bf16.mxu0 0
    %256 = vmatmul.mubr.bf16.gmra.mxu0 %v124
    %v257 = vpop.f32.mrf.mxu0
    %v258 = vadd.f32 0.0, %v257
    %v259 = vpop.f32.mrf.mxu0
    %v260 = vpop.f32.mrf.mxu0
    %v261 = vadd.f32 0.0, %v260
    %v262 = vpop.f32.mrf.mxu0
    %263 = vmatprep.mubr.bf16.mxu0 0
    %264 = vmatmul.mubr.bf16.gmra.mxu0 %v125
    %v265 = vpop.f32.mrf.mxu0
    %v266 = vadd.f32 0.0, %v265
    %v267 = vpop.f32.mrf.mxu0
    %v268 = vpop.f32.mrf.mxu0
    %v269 = vadd.f32 0.0, %v268
    %v270 = vpop.f32.mrf.mxu0
    %271 = vmatprep.mubr.bf16.mxu0 0
    %272 = vmatmul.mubr.bf16.gmra.mxu0 %v126
    %v273 = vpop.f32.mrf.mxu0
    %v274 = vadd.f32 0.0, %v273
    %v275 = vpop.f32.mrf.mxu0
    %v276 = vpop.f32.mrf.mxu0
    %v277 = vadd.f32 0.0, %v276
    %v278 = vpop.f32.mrf.mxu0
    %279 = vdwg.mxu0
    %v280 = vadd.f32 %v39, %v218
    %v281 = vadd.f32 %v40, %v221
    %v282 = vadd.f32 %v41, %v226
    %v283 = vadd.f32 %v42, %v229
    %v284 = vadd.f32 %v43, %v234
    %v285 = vadd.f32 %v44, %v237
    %v286 = vadd.f32 %v45, %v242
    %v287 = vadd.f32 %v46, %v245
    %v288 = vadd.f32 %v47, %v250
    %v289 = vadd.f32 %v48, %v253
    %v290 = vadd.f32 %v49, %v258
    %v291 = vadd.f32 %v50, %v261
    %v292 = vadd.f32 %v51, %v266
    %v293 = vadd.f32 %v52, %v269
    %v294 = vadd.f32 %v53, %v274
    %v295 = vadd.f32 %v54, %v277
    %296 = vst [vmem:[#allocation2] sm:$0xff] %v280
    %297 = vst [vmem:[#allocation2 + $0x8] sm:$0xff] %v281
    %298 = vst [vmem:[#allocation2 + $0x10] sm:$0xff] %v282
    %299 = vst [vmem:[#allocation2 + $0x18] sm:$0xff] %v283
    %300 = vst [vmem:[#allocation2 + $0x20] sm:$0xff] %v284
    %301 = vst [vmem:[#allocation2 + $0x28] sm:$0xff] %v285
    %302 = vst [vmem:[#allocation2 + $0x30] sm:$0xff] %v286
    %303 = vst [vmem:[#allocation2 + $0x38] sm:$0xff] %v287
    %304 = vst [vmem:[#allocation2 + $0x40] sm:$0xff] %v288
    %305 = vst [vmem:[#allocation2 + $0x48] sm:$0xff] %v289
    %306 = vst [vmem:[#allocation2 + $0x50] sm:$0xff] %v290
    %307 = vst [vmem:[#allocation2 + $0x58] sm:$0xff] %v291
    %308 = vst [vmem:[#allocation2 + $0x60] sm:$0xff] %v292
    %309 = vst [vmem:[#allocation2 + $0x68] sm:$0xff] %v293
    %310 = vst [vmem:[#allocation2 + $0x70] sm:$0xff] %v294
    %311 = vst [vmem:[#allocation2 + $0x78] sm:$0xff] %v295
    // Predicated region
    $region22: #{bottleneck_forward.11} parent=1 // pred_check
      %p312 = pneg %p19
    $region23: #{bottleneck_forward.11} parent=1 // pred_check_branch
      %314 = sbr.rel (%p312) target = $region25
    $region24: #{bottleneck_forward.11} parent=1 // pred_region
      %v315 = vld [vmem:[#allocation2] sm:$0xff]
      %v316 = vld [vmem:[#allocation2 + $0x8] sm:$0xff]
      %v317 = vld [vmem:[#allocation2 + $0x10] sm:$0xff]
      %v318 = vld [vmem:[#allocation2 + $0x18] sm:$0xff]
      %v319 = vld [vmem:[#allocation2 + $0x20] sm:$0xff]
      %v320 = vld [vmem:[#allocation2 + $0x28] sm:$0xff]
      %v321 = vld [vmem:[#allocation2 + $0x30] sm:$0xff]
      %v322 = vld [vmem:[#allocation2 + $0x38] sm:$0xff]
      %v323 = vld [vmem:[#allocation2 + $0x40] sm:$0xff]
      %v324 = vld [vmem:[#allocation2 + $0x48] sm:$0xff]
      %v325 = vld [vmem:[#allocation2 + $0x50] sm:$0xff]
      %v326 = vld [vmem:[#allocation2 + $0x58] sm:$0xff]
      %v327 = vld [vmem:[#allocation2 + $0x60] sm:$0xff]
      %v328 = vld [vmem:[#allocation2 + $0x68] sm:$0xff]
      %v329 = vld [vmem:[#allocation2 + $0x70] sm:$0xff]
      %v330 = vld [vmem:[#allocation2 + $0x78] sm:$0xff]
      %v331 = vld [vmem:[%s2] sm:$0x1]
      %v333 = vlaneseq
      %v334 = vshrl.u32 %v333, 7
      %v335 = vsub.s32 0, %v334
      %v336 = vrot.slane %v331, %v335
      %v338 = vadd.f32 %v315, %v336
      %v339 = vadd.f32 %v316, %v336
      %v340 = vadd.f32 %v317, %v336
      %v341 = vadd.f32 %v318, %v336
      %v342 = vadd.f32 %v319, %v336
      %v343 = vadd.f32 %v320, %v336
      %v344 = vadd.f32 %v321, %v336
      %v345 = vadd.f32 %v322, %v336
      %v346 = vadd.f32 %v323, %v336
      %v347 = vadd.f32 %v324, %v336
      %v348 = vadd.f32 %v325, %v336
      %v349 = vadd.f32 %v326, %v336
      %v350 = vadd.f32 %v327, %v336
      %v351 = vadd.f32 %v328, %v336
      %v352 = vadd.f32 %v329, %v336
      %v353 = vadd.f32 %v330, %v336
      %v354 = vld [vmem:[%s3] sm:$0xf]
      %v355 = vld [vmem:[%s3 + $0x4] sm:$0xf]
      %v356 = vld [vmem:[%s3 + $0x8] sm:$0xf]
      %v357 = vld [vmem:[%s3 + $0xc] sm:$0xf]
      %v358 = vld [vmem:[%s3 + $0x10] sm:$0xf]
      %v359 = vld [vmem:[%s3 + $0x14] sm:$0xf]
      %v360 = vld [vmem:[%s3 + $0x18] sm:$0xf]
      %v361 = vld [vmem:[%s3 + $0x1c] sm:$0xf]
      %v362 = vld [vmem:[%s3 + $0x20] sm:$0xf]
      %v363 = vld [vmem:[%s3 + $0x24] sm:$0xf]
      %v364 = vld [vmem:[%s3 + $0x28] sm:$0xf]
      %v365 = vld [vmem:[%s3 + $0x2c] sm:$0xf]
      %v366 = vld [vmem:[%s3 + $0x30] sm:$0xf]
      %v367 = vld [vmem:[%s3 + $0x34] sm:$0xf]
      %v368 = vld [vmem:[%s3 + $0x38] sm:$0xf]
      %v369 = vld [vmem:[%s3 + $0x3c] sm:$0xf]
      %v370 = vunpack.c.l.bf16 %v354
      %v371 = vunpack.c.l.bf16 %v355
      %v372 = vunpack.c.l.bf16 %v356
      %v373 = vunpack.c.l.bf16 %v357
      %v374 = vunpack.c.l.bf16 %v358
      %v375 = vunpack.c.l.bf16 %v359
      %v376 = vunpack.c.l.bf16 %v360
      %v377 = vunpack.c.l.bf16 %v361
      %v378 = vunpack.c.l.bf16 %v362
      %v379 = vunpack.c.l.bf16 %v363
      %v380 = vunpack.c.l.bf16 %v364
      %v381 = vunpack.c.l.bf16 %v365
      %v382 = vunpack.c.l.bf16 %v366
      %v383 = vunpack.c.l.bf16 %v367
      %v384 = vunpack.c.l.bf16 %v368
      %v385 = vunpack.c.l.bf16 %v369
      %v386 = vadd.f32 %v338, %v370
      %v387 = vadd.f32 %v339, %v371
      %v388 = vadd.f32 %v340, %v372
      %v389 = vadd.f32 %v341, %v373
      %v390 = vadd.f32 %v342, %v374
      %v391 = vadd.f32 %v343, %v375
      %v392 = vadd.f32 %v344, %v376
      %v393 = vadd.f32 %v345, %v377
      %v394 = vadd.f32 %v346, %v378
      %v395 = vadd.f32 %v347, %v379
      %v396 = vadd.f32 %v348, %v380
      %v397 = vadd.f32 %v349, %v381
      %v398 = vadd.f32 %v350, %v382
      %v399 = vadd.f32 %v351, %v383
      %v400 = vadd.f32 %v352, %v384
      %v401 = vadd.f32 %v353, %v385
      %v402 = vmax.f32 %v386, 0.0
      %v403 = vmax.f32 %v387, 0.0
      %v404 = vmax.f32 %v388, 0.0
      %v405 = vmax.f32 %v389, 0.0
      %v406 = vmax.f32 %v390, 0.0
      %v407 = vmax.f32 %v391, 0.0
      %v408 = vmax.f32 %v392, 0.0
      %v409 = vmax.f32 %v393, 0.0
      %v410 = vmax.f32 %v394, 0.0
      %v411 = vmax.f32 %v395, 0.0
      %v412 = vmax.f32 %v396, 0.0
      %v413 = vmax.f32 %v397, 0.0
      %v414 = vmax.f32 %v398, 0.0
      %v415 = vmax.f32 %v399, 0.0
      %v416 = vmax.f32 %v400, 0.0
      %v417 = vmax.f32 %v401, 0.0
      %418 = vst [vmem:[#allocation3] sm:$0xff] %v402
      %419 = vst [vmem:[#allocation3 + $0x8] sm:$0xff] %v403
      %420 = vst [vmem:[#allocation3 + $0x10] sm:$0xff] %v404
      %421 = vst [vmem:[#allocation3 + $0x18] sm:$0xff] %v405
      %422 = vst [vmem:[#allocation3 + $0x20] sm:$0xff] %v406
      %423 = vst [vmem:[#allocation3 + $0x28] sm:$0xff] %v407
      %424 = vst [vmem:[#allocation3 + $0x30] sm:$0xff] %v408
      %425 = vst [vmem:[#allocation3 + $0x38] sm:$0xff] %v409
      %426 = vst [vmem:[#allocation3 + $0x40] sm:$0xff] %v410
      %427 = vst [vmem:[#allocation3 + $0x48] sm:$0xff] %v411
      %428 = vst [vmem:[#allocation3 + $0x50] sm:$0xff] %v412
      %429 = vst [vmem:[#allocation3 + $0x58] sm:$0xff] %v413
      %430 = vst [vmem:[#allocation3 + $0x60] sm:$0xff] %v414
      %431 = vst [vmem:[#allocation3 + $0x68] sm:$0xff] %v415
      %432 = vst [vmem:[#allocation3 + $0x70] sm:$0xff] %v416
      %433 = vst [vmem:[#allocation3 + $0x78] sm:$0xff] %v417
    $region25: #{bottleneck_forward.11} parent=1 // pred_fallthru
      _
    // Predicated region
    $region26: #{bottleneck_forward.11} parent=1 // pred_check
      _
    $region27: #{bottleneck_forward.11} parent=1 // pred_check_branch
      %435 = sbr.rel (0) target = $region29
    $region28: #{bottleneck_forward.11} parent=1 // pred_region
      %s437 = ssub.s32 2048, 2048
      %438 = vsyncadd [#allocation4], %s437
      %s439 = sshll.u32 [#allocation3], 4
      %s440 = int_to_ptr.vmem [resolvable:$true] %s439
      %445 = dma.vmem_to_hbm [thread:$0]  %s440, 2048, %s4, [#allocation4], 128, 128, 8
    $region29: #{bottleneck_forward.11} parent=1 // pred_fallthru
      _
    // Predicated region
    $region30: #{bottleneck_forward.11} parent=1 // pred_check
      _
    $region31: #{bottleneck_forward.11} parent=1 // pred_check_branch
      %447 = sbr.rel (0) target = $region33
    $region32: #{bottleneck_forward.11} parent=1 // pred_region
      %448 = dma.done [#allocation4], 2048
    $region33: #{bottleneck_forward.11} parent=1 // pred_fallthru
      _
    %449 = vsyncpa [#allocation4], 1

</llo_original>
